<compile_context>
chip_gen: v6e
topology: v6e:2x2x1
jax: 0.10.0
libtpu: 0.0.40
codegen_flags: <defaults>
</compile_context>

<pallas_src>
import jax
import jax.numpy as jnp
from jax.experimental import pallas as pl
from jax.experimental.pallas import tpu as pltpu


# ------------------------------ parameter packing ----------------------------

_LANES = 128


def pack_params(params):
    """Pack every weight/bias into one (rows, 128) f32 buffer (single DMA).

    Each array is padded to (ceil(rows/8)*8, 128); layout maps name ->
    (row_offset, rows, cols) for static in-kernel slicing.
    """
    entries = []
    for l, (wih, whh, b) in enumerate(params["lstm"]):
        entries += [(f"lstm{l}_wih", wih), (f"lstm{l}_whh", whh), (f"lstm{l}_b", b)]
    entries += [("d1_w", params["w1"]), ("d1_b", params["b1"]),
                ("d2_w", params["w2"]), ("d2_b", params["b2"]),
                ("d3_w", params["w3"]), ("d3_b", params["b3"])]

    layout = {}
    blocks = []
    row = 0
    for name, a in entries:
        a = jnp.asarray(a, jnp.float32)
        if a.ndim == 1:
            a = a.reshape(1, -1)
        r, c = a.shape
        assert c <= _LANES, "packer assumes every parameter has <=128 columns"
        rp = -(-r // 8) * 8                      # pad rows to a full sublane tile
        blk = jnp.zeros((rp, _LANES), jnp.float32).at[:r, :c].set(a)
        blocks.append(blk)
        layout[name] = (row, r, c)
        row += rp
    return jnp.concatenate(blocks, axis=0), layout


# ------------------------------ fused kernel --------------------------------

def make_stacked_lstm_kernel(T, Bp, hidden_sizes, layout):
    L = len(hidden_sizes)
    bf16 = jnp.bfloat16
    f32 = jnp.float32

    def kernel(x_ref, p_ref, out_ref):
        # --- static-offset parameter slices out of the single packed buffer ---
        def param(name):
            ro, r, c = layout[name]
            return p_ref[ro:ro + r, 0:c]

        wih = [param(f"lstm{l}_wih").astype(bf16) for l in range(L)]   # (in_l, 4H)
        whh = [param(f"lstm{l}_whh").astype(bf16) for l in range(L)]   # (H, 4H)
        bias = [param(f"lstm{l}_b") for l in range(L)]                 # (1, 4H) f32
        w1 = param("d1_w").astype(bf16); b1 = param("d1_b")
        w2 = param("d2_w").astype(bf16); b2 = param("d2_b")
        w3 = param("d3_w").astype(bf16); b3 = param("d3_b")

        # --- hoisted per-layer gate-activation constants (one EUP pass/step) ---
        # sigmoid(x) = 0.5*tanh(x/2) + 0.5 ; tanh lanes are the g-gate [2H,3H).
        g_mask, g_scale = [], []
        for l in range(L):
            H = hidden_sizes[l]
            col = jax.lax.broadcasted_iota(jnp.int32, (Bp, 4 * H), 1)
            m = jnp.logical_and(col >= 2 * H, col < 3 * H)
            g_mask.append(m)
            g_scale.append(jnp.where(m, 1.0, 0.5).astype(f32))

        # --- hoisted layer-0 input projection over the whole sequence ---------
        proj0 = jnp.dot(x_ref[...].astype(bf16), wih[0],
                        preferred_element_type=f32) + bias[0]          # (T*Bp,4H0)

        def cell(l, pre_gates, c_prev):
            H = hidden_sizes[l]
            th = jnp.tanh(pre_gates * g_scale[l])          # single full-width tanh
            act = jnp.where(g_mask[l], th, 0.5 * th + 0.5)
            i_g = act[:, 0 * H:1 * H]
            f_g = act[:, 1 * H:2 * H]
            g_g = act[:, 2 * H:3 * H]
            o_g = act[:, 3 * H:4 * H]
            c_new = f_g * c_prev + i_g * g_g
            h_new = o_g * jnp.tanh(c_new)
            return h_new, c_new

        h = [jnp.zeros((Bp, hidden_sizes[l]), f32) for l in range(L)]
        c = [jnp.zeros((Bp, hidden_sizes[l]), f32) for l in range(L)]
        below = [None] * L        # h emitted by layer l on the previous wave

        # --- wavefront over (layer, time): wave w runs (l, t = w - l) ---------
        # Dependent chain length T+L-1; the per-wave per-layer chains are
        # independent, so their MXU/EUP latencies hide each other.
        for wave in range(T + L - 1):
            produced = list(below)
            for l in range(L):
                t = wave - l
                if t < 0 or t >= T:
                    continue
                if l == 0:
                    pre = proj0[t * Bp:(t + 1) * Bp, :] + jnp.dot(
                        h[0].astype(bf16), whh[0], preferred_element_type=f32)
                else:
                    pre = (jnp.dot(below[l - 1].astype(bf16), wih[l],
                                   preferred_element_type=f32)
                           + jnp.dot(h[l].astype(bf16), whh[l],
                                     preferred_element_type=f32)
                           + bias[l])
                h[l], c[l] = cell(l, pre, c[l])
                produced[l] = h[l]
            below = produced

        # --- dense head (dropout = identity in eval mode) ----------------------
        d1 = jnp.maximum(
            jnp.dot(h[L - 1].astype(bf16), w1, preferred_element_type=f32) + b1, 0.0)
        d2 = jnp.maximum(
            jnp.dot(d1.astype(bf16), w2, preferred_element_type=f32) + b2, 0.0)
        out_ref[...] = (
            jnp.dot(d2.astype(bf16), w3, preferred_element_type=f32) + b3)

    return kernel


# -------------------------------- wrapper ------------------------------------

def build_forward(B, T, in_size, hidden_sizes, output_size, layout):
    hidden_sizes = tuple(int(h) for h in hidden_sizes)
    Bp = max(8, -(-B // 8) * 8)        # pad batch to a full (8,·) sublane tile
    kernel = make_stacked_lstm_kernel(T, Bp, hidden_sizes, layout)
    vmem = pl.BlockSpec(memory_space=pltpu.MemorySpace.VMEM)

    @jax.jit
    def forward(x, packed):
        # time-major, batch padded; rows are (t*Bp + b) so per-step slices are
        # whole (8,128) tiles inside the kernel.
        x_tm = jnp.transpose(x, (1, 0, 2))                        # (T, B, I)
        x_tm = jnp.pad(x_tm, ((0, 0), (0, Bp - B), (0, 0)))       # (T, Bp, I)
        x2d = x_tm.reshape(T * Bp, in_size)
        out = pl.pallas_call(
            kernel,
            out_shape=jax.ShapeDtypeStruct((Bp, output_size), jnp.float32),
            in_specs=[vmem, vmem],
            out_specs=vmem,
        )(x2d, packed)
        return out[:B]

    return forward


# --------------------------- parameter construction ---------------------------

def init_params(key, input_size, hidden_sizes, output_size):
    """PyTorch layout transposed: W_ih -> (in, 4H), W_hh -> (H, 4H),
    combined bias -> (1, 4H); gate order (i, f, g, o). Dense W -> (in, out)."""
    layers = []
    prev = input_size
    for H in hidden_sizes:
        k = 1.0 / (H ** 0.5)
        key, k1, k2, k3, k4 = jax.random.split(key, 5)
        wih = jax.random.uniform(k1, (prev, 4 * H), jnp.float32, -k, k)
        whh = jax.random.uniform(k2, (H, 4 * H), jnp.float32, -k, k)
        b_ih = jax.random.uniform(k3, (4 * H,), jnp.float32, -k, k)
        b_hh = jax.random.uniform(k4, (4 * H,), jnp.float32, -k, k)
        layers.append((wih, whh, (b_ih + b_hh).reshape(1, -1)))
        prev = H

    def linear(key, n_in, n_out):
        k = 1.0 / (n_in ** 0.5)
        key, kw, kb = jax.random.split(key, 3)
        w = jax.random.uniform(kw, (n_in, n_out), jnp.float32, -k, k)
        b = jax.random.uniform(kb, (1, n_out), jnp.float32, -k, k)
        return key, w, b

    key, w1, b1 = linear(key, hidden_sizes[-1], 64)
    key, w2, b2 = linear(key, 64, 32)
    key, w3, b3 = linear(key, 32, output_size)
    return {"lstm": layers, "w1": w1, "b1": b1, "w2": w2, "b2": b2,
            "w3": w3, "b3": b3}


# ----------------------------- pure-JAX reference -----------------------------

def reference_forward(x, params, mxu_dtype=jnp.float32):
    """Module semantics; mxu_dtype=bfloat16 mirrors the kernel's MXU-operand cast."""
    def mm(a, b):
        return jnp.dot(a.astype(mxu_dtype), b.astype(mxu_dtype),
                       preferred_element_type=jnp.float32)

    B = x.shape[0]
    h_seq = jnp.transpose(x, (1, 0, 2))                      # (T, B, I)
    for (wih, whh, b) in params["lstm"]:
        H = whh.shape[0]

        def step(carry, x_t, wih=wih, whh=whh, b=b, H=H):
            h, c = carry
            gates = mm(x_t, wih) + mm(h, whh) + b
            i = jax.nn.sigmoid(gates[:, 0 * H:1 * H])
            f = jax.nn.sigmoid(gates[:, 1 * H:2 * H])
            g = jnp.tanh(gates[:, 2 * H:3 * H])
            o = jax.nn.sigmoid(gates[:, 3 * H:4 * H])
            c = f * c + i * g
            h = o * jnp.tanh(c)
            return (h, c), h

        (_, _), h_seq = jax.lax.scan(
            step, (jnp.zeros((B, H)), jnp.zeros((B, H))), h_seq)
    h_last = h_seq[-1]
    d1 = jax.nn.relu(mm(h_last, params["w1"]) + params["b1"])
    d2 = jax.nn.relu(mm(d1, params["w2"]) + params["b2"])
    return mm(d2, params["w3"]) + params["b3"]


# ---------------------------------- main --------------------------------------

if __name__ == "__main__":
    B, T = 2, 8
    input_size, hidden_sizes, output_size = 4, [32, 32], 1

    key = jax.random.PRNGKey(0)
    key, xk = jax.random.split(key)
    x = jax.random.normal(xk, (B, T, input_size), jnp.float32)

    params = init_params(key, input_size, hidden_sizes, output_size)
    packed, layout = pack_params(params)

    forward = build_forward(B, T, input_size, hidden_sizes, output_size, layout)
    out = jax.block_until_ready(forward(x, packed))

    assert out.shape == (B, output_size)

    # Tight check vs. a reference that mirrors the bf16 MXU-operand cast.
    ref_bf16 = reference_forward(x, params, jnp.bfloat16)
    assert jnp.allclose(out, ref_bf16, atol=2e-3, rtol=2e-3), (out, ref_bf16)

    # Loose check vs. the exact f32 module semantics (bf16 MXU operands relax
    # exact parity, per review guidance).
    ref_f32 = reference_forward(x, params, jnp.float32)
    assert jnp.allclose(out, ref_f32, atol=1e-1, rtol=1e-1), (out, ref_f32)

    print("KERNEL_OK")
</pallas_src>

<mosaic_0001>
module attributes {stable_mosaic.version = 11 : i64} {
  func.func @kernel(%arg0: memref<64x4xf32, #tpu.memory_space<vmem>>, %arg1: memref<272x128xf32, #tpu.memory_space<vmem>>, %arg2: memref<8x1xf32, #tpu.memory_space<vmem>>) attributes {dimension_semantics = [], scalar_prefetch = 0 : i64, scratch_operands = 0 : i64, tpu.core_type = #tpu.core_type<tc>} {
    %c0 = arith.constant 0 : index
    %c0_0 = arith.constant 0 : index
    %0 = vector.load %arg1[%c0, %c0_0] : memref<272x128xf32, #tpu.memory_space<vmem>>, vector<4x128xf32>
    %1 = arith.truncf %0 : vector<4x128xf32> to vector<4x128xbf16>
    %c48 = arith.constant 48 : index
    %c0_1 = arith.constant 0 : index
    %2 = vector.load %arg1[%c48, %c0_1] : memref<272x128xf32, #tpu.memory_space<vmem>>, vector<32x128xf32>
    %3 = arith.truncf %2 : vector<32x128xf32> to vector<32x128xbf16>
    %c8 = arith.constant 8 : index
    %c0_2 = arith.constant 0 : index
    %4 = vector.load %arg1[%c8, %c0_2] : memref<272x128xf32, #tpu.memory_space<vmem>>, vector<32x128xf32>
    %5 = arith.truncf %4 : vector<32x128xf32> to vector<32x128xbf16>
    %c80 = arith.constant 80 : index
    %c0_3 = arith.constant 0 : index
    %6 = vector.load %arg1[%c80, %c0_3] : memref<272x128xf32, #tpu.memory_space<vmem>>, vector<32x128xf32>
    %7 = arith.truncf %6 : vector<32x128xf32> to vector<32x128xbf16>
    %c40 = arith.constant 40 : index
    %c0_4 = arith.constant 0 : index
    %8 = vector.load %arg1[%c40, %c0_4] : memref<272x128xf32, #tpu.memory_space<vmem>>, vector<1x128xf32>
    %c112 = arith.constant 112 : index
    %c0_5 = arith.constant 0 : index
    %9 = vector.load %arg1[%c112, %c0_5] : memref<272x128xf32, #tpu.memory_space<vmem>>, vector<1x128xf32>
    %c120 = arith.constant 120 : index
    %c0_6 = arith.constant 0 : index
    %10 = vector.load %arg1[%c120, %c0_6] : memref<272x128xf32, #tpu.memory_space<vmem>>, vector<32x64xf32>
    %11 = arith.truncf %10 : vector<32x64xf32> to vector<32x64xbf16>
    %c152 = arith.constant 152 : index
    %c0_7 = arith.constant 0 : index
    %12 = vector.load %arg1[%c152, %c0_7] : memref<272x128xf32, #tpu.memory_space<vmem>>, vector<1x64xf32>
    %c160 = arith.constant 160 : index
    %c0_8 = arith.constant 0 : index
    %13 = vector.load %arg1[%c160, %c0_8] : memref<272x128xf32, #tpu.memory_space<vmem>>, vector<64x32xf32>
    %14 = arith.truncf %13 : vector<64x32xf32> to vector<64x32xbf16>
    %c224 = arith.constant 224 : index
    %c0_9 = arith.constant 0 : index
    %15 = vector.load %arg1[%c224, %c0_9] : memref<272x128xf32, #tpu.memory_space<vmem>>, vector<1x32xf32>
    %c232 = arith.constant 232 : index
    %c0_10 = arith.constant 0 : index
    %16 = vector.load %arg1[%c232, %c0_10] : memref<272x128xf32, #tpu.memory_space<vmem>>, vector<32x1xf32>
    %17 = arith.truncf %16 : vector<32x1xf32> to vector<32x1xbf16>
    %c264 = arith.constant 264 : index
    %c0_11 = arith.constant 0 : index
    %18 = vector.load %arg1[%c264, %c0_11] : memref<272x128xf32, #tpu.memory_space<vmem>>, vector<1x1xf32>
    %19 = tpu.iota {dimensions = array<i32: 1>} : vector<8x128xi32>
    %c64_i32 = arith.constant 64 : i32
    %20 = vector.broadcast %c64_i32 : i32 to vector<8x128xi32>
    %21 = arith.cmpi sge, %19, %20 : vector<8x128xi32>
    %c96_i32 = arith.constant 96 : i32
    %22 = vector.broadcast %c96_i32 : i32 to vector<8x128xi32>
    %23 = arith.cmpi slt, %19, %22 : vector<8x128xi32>
    %24 = arith.andi %21, %23 : vector<8x128xi1>
    %cst = arith.constant 1.000000e+00 : f32
    %cst_12 = arith.constant 5.000000e-01 : f32
    %25 = vector.broadcast %cst : f32 to vector<8x128xf32>
    %26 = vector.broadcast %cst_12 : f32 to vector<8x128xf32>
    %27 = arith.select %24, %25, %26 : vector<8x128xi1>, vector<8x128xf32>
    %28 = tpu.iota {dimensions = array<i32: 1>} : vector<8x128xi32>
    %c64_i32_13 = arith.constant 64 : i32
    %29 = vector.broadcast %c64_i32_13 : i32 to vector<8x128xi32>
    %30 = arith.cmpi sge, %28, %29 : vector<8x128xi32>
    %c96_i32_14 = arith.constant 96 : i32
    %31 = vector.broadcast %c96_i32_14 : i32 to vector<8x128xi32>
    %32 = arith.cmpi slt, %28, %31 : vector<8x128xi32>
    %33 = arith.andi %30, %32 : vector<8x128xi1>
    %cst_15 = arith.constant 1.000000e+00 : f32
    %cst_16 = arith.constant 5.000000e-01 : f32
    %34 = vector.broadcast %cst_15 : f32 to vector<8x128xf32>
    %35 = vector.broadcast %cst_16 : f32 to vector<8x128xf32>
    %36 = arith.select %33, %34, %35 : vector<8x128xi1>, vector<8x128xf32>
    %c0_17 = arith.constant 0 : index
    %c0_18 = arith.constant 0 : index
    %37 = vector.load %arg0[%c0_17, %c0_18] : memref<64x4xf32, #tpu.memory_space<vmem>>, vector<64x4xf32>
    %38 = arith.truncf %37 : vector<64x4xf32> to vector<64x4xbf16>
    %cst_19 = arith.constant dense<0.000000e+00> : vector<64x128xf32>
    %39 = tpu.matmul %38, %1, %cst_19 {dimension_numbers = #tpu.dot_dimension_numbers<[1], [0], [0], [1], [0, 0, 1, 1], [], []>} : vector<64x4xbf16>, vector<4x128xbf16>, vector<64x128xf32> -> vector<64x128xf32>
    %40 = vector.broadcast %8 : vector<1x128xf32> to vector<64x128xf32>
    %41 = arith.addf %39, %40 : vector<64x128xf32>
    %cst_20 = arith.constant 0.000000e+00 : f32
    %42 = vector.broadcast %cst_20 : f32 to vector<8x32xf32>
    %cst_21 = arith.constant 0.000000e+00 : f32
    %43 = vector.broadcast %cst_21 : f32 to vector<8x32xf32>
    %cst_22 = arith.constant 0.000000e+00 : f32
    %44 = vector.broadcast %cst_22 : f32 to vector<8x32xf32>
    %cst_23 = arith.constant 0.000000e+00 : f32
    %45 = vector.broadcast %cst_23 : f32 to vector<8x32xf32>
    %46 = vector.extract_strided_slice %41 {offsets = [0, 0], sizes = [8, 128], strides = [1, 1]} : vector<64x128xf32> to vector<8x128xf32>
    %47 = arith.truncf %42 : vector<8x32xf32> to vector<8x32xbf16>
    %cst_24 = arith.constant dense<0.000000e+00> : vector<8x128xf32>
    %48 = tpu.matmul %47, %5, %cst_24 {dimension_numbers = #tpu.dot_dimension_numbers<[1], [0], [0], [1], [0, 0, 1, 1], [], []>} : vector<8x32xbf16>, vector<32x128xbf16>, vector<8x128xf32> -> vector<8x128xf32>
    %49 = arith.addf %46, %48 : vector<8x128xf32>
    %50 = arith.mulf %49, %27 : vector<8x128xf32>
    %51 = math.tanh %50 : vector<8x128xf32>
    %cst_25 = arith.constant 5.000000e-01 : f32
    %52 = vector.broadcast %cst_25 : f32 to vector<8x128xf32>
    %53 = arith.mulf %52, %51 : vector<8x128xf32>
    %cst_26 = arith.constant 5.000000e-01 : f32
    %54 = vector.broadcast %cst_26 : f32 to vector<8x128xf32>
    %55 = arith.addf %53, %54 : vector<8x128xf32>
    %56 = arith.select %24, %51, %55 : vector<8x128xi1>, vector<8x128xf32>
    %57 = vector.extract_strided_slice %56 {offsets = [0, 0], sizes = [8, 32], strides = [1, 1]} : vector<8x128xf32> to vector<8x32xf32>
    %58 = vector.extract_strided_slice %56 {offsets = [0, 32], sizes = [8, 32], strides = [1, 1]} : vector<8x128xf32> to vector<8x32xf32>
    %59 = vector.extract_strided_slice %56 {offsets = [0, 64], sizes = [8, 32], strides = [1, 1]} : vector<8x128xf32> to vector<8x32xf32>
    %60 = vector.extract_strided_slice %56 {offsets = [0, 96], sizes = [8, 32], strides = [1, 1]} : vector<8x128xf32> to vector<8x32xf32>
    %61 = arith.mulf %58, %44 : vector<8x32xf32>
    %62 = arith.mulf %57, %59 : vector<8x32xf32>
    %63 = arith.addf %61, %62 : vector<8x32xf32>
    %64 = math.tanh %63 : vector<8x32xf32>
    %65 = arith.mulf %60, %64 : vector<8x32xf32>
    %66 = vector.extract_strided_slice %41 {offsets = [8, 0], sizes = [8, 128], strides = [1, 1]} : vector<64x128xf32> to vector<8x128xf32>
    %67 = arith.truncf %65 : vector<8x32xf32> to vector<8x32xbf16>
    %cst_27 = arith.constant dense<0.000000e+00> : vector<8x128xf32>
    %68 = tpu.matmul %67, %5, %cst_27 {dimension_numbers = #tpu.dot_dimension_numbers<[1], [0], [0], [1], [0, 0, 1, 1], [], []>} : vector<8x32xbf16>, vector<32x128xbf16>, vector<8x128xf32> -> vector<8x128xf32>
    %69 = arith.addf %66, %68 : vector<8x128xf32>
    %70 = arith.mulf %69, %27 : vector<8x128xf32>
    %71 = math.tanh %70 : vector<8x128xf32>
    %cst_28 = arith.constant 5.000000e-01 : f32
    %72 = vector.broadcast %cst_28 : f32 to vector<8x128xf32>
    %73 = arith.mulf %72, %71 : vector<8x128xf32>
    %cst_29 = arith.constant 5.000000e-01 : f32
    %74 = vector.broadcast %cst_29 : f32 to vector<8x128xf32>
    %75 = arith.addf %73, %74 : vector<8x128xf32>
    %76 = arith.select %24, %71, %75 : vector<8x128xi1>, vector<8x128xf32>
    %77 = vector.extract_strided_slice %76 {offsets = [0, 0], sizes = [8, 32], strides = [1, 1]} : vector<8x128xf32> to vector<8x32xf32>
    %78 = vector.extract_strided_slice %76 {offsets = [0, 32], sizes = [8, 32], strides = [1, 1]} : vector<8x128xf32> to vector<8x32xf32>
    %79 = vector.extract_strided_slice %76 {offsets = [0, 64], sizes = [8, 32], strides = [1, 1]} : vector<8x128xf32> to vector<8x32xf32>
    %80 = vector.extract_strided_slice %76 {offsets = [0, 96], sizes = [8, 32], strides = [1, 1]} : vector<8x128xf32> to vector<8x32xf32>
    %81 = arith.mulf %78, %63 : vector<8x32xf32>
    %82 = arith.mulf %77, %79 : vector<8x32xf32>
    %83 = arith.addf %81, %82 : vector<8x32xf32>
    %84 = math.tanh %83 : vector<8x32xf32>
    %85 = arith.mulf %80, %84 : vector<8x32xf32>
    %86 = arith.truncf %65 : vector<8x32xf32> to vector<8x32xbf16>
    %cst_30 = arith.constant dense<0.000000e+00> : vector<8x128xf32>
    %87 = tpu.matmul %86, %3, %cst_30 {dimension_numbers = #tpu.dot_dimension_numbers<[1], [0], [0], [1], [0, 0, 1, 1], [], []>} : vector<8x32xbf16>, vector<32x128xbf16>, vector<8x128xf32> -> vector<8x128xf32>
    %88 = arith.truncf %43 : vector<8x32xf32> to vector<8x32xbf16>
    %cst_31 = arith.constant dense<0.000000e+00> : vector<8x128xf32>
    %89 = tpu.matmul %88, %7, %cst_31 {dimension_numbers = #tpu.dot_dimension_numbers<[1], [0], [0], [1], [0, 0, 1, 1], [], []>} : vector<8x32xbf16>, vector<32x128xbf16>, vector<8x128xf32> -> vector<8x128xf32>
    %90 = arith.addf %87, %89 : vector<8x128xf32>
    %91 = vector.broadcast %9 : vector<1x128xf32> to vector<8x128xf32>
    %92 = arith.addf %90, %91 : vector<8x128xf32>
    %93 = arith.mulf %92, %36 : vector<8x128xf32>
    %94 = math.tanh %93 : vector<8x128xf32>
    %cst_32 = arith.constant 5.000000e-01 : f32
    %95 = vector.broadcast %cst_32 : f32 to vector<8x128xf32>
    %96 = arith.mulf %95, %94 : vector<8x128xf32>
    %cst_33 = arith.constant 5.000000e-01 : f32
    %97 = vector.broadcast %cst_33 : f32 to vector<8x128xf32>
    %98 = arith.addf %96, %97 : vector<8x128xf32>
    %99 = arith.select %33, %94, %98 : vector<8x128xi1>, vector<8x128xf32>
    %100 = vector.extract_strided_slice %99 {offsets = [0, 0], sizes = [8, 32], strides = [1, 1]} : vector<8x128xf32> to vector<8x32xf32>
    %101 = vector.extract_strided_slice %99 {offsets = [0, 32], sizes = [8, 32], strides = [1, 1]} : vector<8x128xf32> to vector<8x32xf32>
    %102 = vector.extract_strided_slice %99 {offsets = [0, 64], sizes = [8, 32], strides = [1, 1]} : vector<8x128xf32> to vector<8x32xf32>
    %103 = vector.extract_strided_slice %99 {offsets = [0, 96], sizes = [8, 32], strides = [1, 1]} : vector<8x128xf32> to vector<8x32xf32>
    %104 = arith.mulf %101, %45 : vector<8x32xf32>
    %105 = arith.mulf %100, %102 : vector<8x32xf32>
    %106 = arith.addf %104, %105 : vector<8x32xf32>
    %107 = math.tanh %106 : vector<8x32xf32>
    %108 = arith.mulf %103, %107 : vector<8x32xf32>
    %109 = vector.extract_strided_slice %41 {offsets = [16, 0], sizes = [8, 128], strides = [1, 1]} : vector<64x128xf32> to vector<8x128xf32>
    %110 = arith.truncf %85 : vector<8x32xf32> to vector<8x32xbf16>
    %cst_34 = arith.constant dense<0.000000e+00> : vector<8x128xf32>
    %111 = tpu.matmul %110, %5, %cst_34 {dimension_numbers = #tpu.dot_dimension_numbers<[1], [0], [0], [1], [0, 0, 1, 1], [], []>} : vector<8x32xbf16>, vector<32x128xbf16>, vector<8x128xf32> -> vector<8x128xf32>
    %112 = arith.addf %109, %111 : vector<8x128xf32>
    %113 = arith.mulf %112, %27 : vector<8x128xf32>
    %114 = math.tanh %113 : vector<8x128xf32>
    %cst_35 = arith.constant 5.000000e-01 : f32
    %115 = vector.broadcast %cst_35 : f32 to vector<8x128xf32>
    %116 = arith.mulf %115, %114 : vector<8x128xf32>
    %cst_36 = arith.constant 5.000000e-01 : f32
    %117 = vector.broadcast %cst_36 : f32 to vector<8x128xf32>
    %118 = arith.addf %116, %117 : vector<8x128xf32>
    %119 = arith.select %24, %114, %118 : vector<8x128xi1>, vector<8x128xf32>
    %120 = vector.extract_strided_slice %119 {offsets = [0, 0], sizes = [8, 32], strides = [1, 1]} : vector<8x128xf32> to vector<8x32xf32>
    %121 = vector.extract_strided_slice %119 {offsets = [0, 32], sizes = [8, 32], strides = [1, 1]} : vector<8x128xf32> to vector<8x32xf32>
    %122 = vector.extract_strided_slice %119 {offsets = [0, 64], sizes = [8, 32], strides = [1, 1]} : vector<8x128xf32> to vector<8x32xf32>
    %123 = vector.extract_strided_slice %119 {offsets = [0, 96], sizes = [8, 32], strides = [1, 1]} : vector<8x128xf32> to vector<8x32xf32>
    %124 = arith.mulf %121, %83 : vector<8x32xf32>
    %125 = arith.mulf %120, %122 : vector<8x32xf32>
    %126 = arith.addf %124, %125 : vector<8x32xf32>
    %127 = math.tanh %126 : vector<8x32xf32>
    %128 = arith.mulf %123, %127 : vector<8x32xf32>
    %129 = arith.truncf %85 : vector<8x32xf32> to vector<8x32xbf16>
    %cst_37 = arith.constant dense<0.000000e+00> : vector<8x128xf32>
    %130 = tpu.matmul %129, %3, %cst_37 {dimension_numbers = #tpu.dot_dimension_numbers<[1], [0], [0], [1], [0, 0, 1, 1], [], []>} : vector<8x32xbf16>, vector<32x128xbf16>, vector<8x128xf32> -> vector<8x128xf32>
    %131 = arith.truncf %108 : vector<8x32xf32> to vector<8x32xbf16>
    %cst_38 = arith.constant dense<0.000000e+00> : vector<8x128xf32>
    %132 = tpu.matmul %131, %7, %cst_38 {dimension_numbers = #tpu.dot_dimension_numbers<[1], [0], [0], [1], [0, 0, 1, 1], [], []>} : vector<8x32xbf16>, vector<32x128xbf16>, vector<8x128xf32> -> vector<8x128xf32>
    %133 = arith.addf %130, %132 : vector<8x128xf32>
    %134 = vector.broadcast %9 : vector<1x128xf32> to vector<8x128xf32>
    %135 = arith.addf %133, %134 : vector<8x128xf32>
    %136 = arith.mulf %135, %36 : vector<8x128xf32>
    %137 = math.tanh %136 : vector<8x128xf32>
    %cst_39 = arith.constant 5.000000e-01 : f32
    %138 = vector.broadcast %cst_39 : f32 to vector<8x128xf32>
    %139 = arith.mulf %138, %137 : vector<8x128xf32>
    %cst_40 = arith.constant 5.000000e-01 : f32
    %140 = vector.broadcast %cst_40 : f32 to vector<8x128xf32>
    %141 = arith.addf %139, %140 : vector<8x128xf32>
    %142 = arith.select %33, %137, %141 : vector<8x128xi1>, vector<8x128xf32>
    %143 = vector.extract_strided_slice %142 {offsets = [0, 0], sizes = [8, 32], strides = [1, 1]} : vector<8x128xf32> to vector<8x32xf32>
    %144 = vector.extract_strided_slice %142 {offsets = [0, 32], sizes = [8, 32], strides = [1, 1]} : vector<8x128xf32> to vector<8x32xf32>
    %145 = vector.extract_strided_slice %142 {offsets = [0, 64], sizes = [8, 32], strides = [1, 1]} : vector<8x128xf32> to vector<8x32xf32>
    %146 = vector.extract_strided_slice %142 {offsets = [0, 96], sizes = [8, 32], strides = [1, 1]} : vector<8x128xf32> to vector<8x32xf32>
    %147 = arith.mulf %144, %106 : vector<8x32xf32>
    %148 = arith.mulf %143, %145 : vector<8x32xf32>
    %149 = arith.addf %147, %148 : vector<8x32xf32>
    %150 = math.tanh %149 : vector<8x32xf32>
    %151 = arith.mulf %146, %150 : vector<8x32xf32>
    %152 = vector.extract_strided_slice %41 {offsets = [24, 0], sizes = [8, 128], strides = [1, 1]} : vector<64x128xf32> to vector<8x128xf32>
    %153 = arith.truncf %128 : vector<8x32xf32> to vector<8x32xbf16>
    %cst_41 = arith.constant dense<0.000000e+00> : vector<8x128xf32>
    %154 = tpu.matmul %153, %5, %cst_41 {dimension_numbers = #tpu.dot_dimension_numbers<[1], [0], [0], [1], [0, 0, 1, 1], [], []>} : vector<8x32xbf16>, vector<32x128xbf16>, vector<8x128xf32> -> vector<8x128xf32>
    %155 = arith.addf %152, %154 : vector<8x128xf32>
    %156 = arith.mulf %155, %27 : vector<8x128xf32>
    %157 = math.tanh %156 : vector<8x128xf32>
    %cst_42 = arith.constant 5.000000e-01 : f32
    %158 = vector.broadcast %cst_42 : f32 to vector<8x128xf32>
    %159 = arith.mulf %158, %157 : vector<8x128xf32>
    %cst_43 = arith.constant 5.000000e-01 : f32
    %160 = vector.broadcast %cst_43 : f32 to vector<8x128xf32>
    %161 = arith.addf %159, %160 : vector<8x128xf32>
    %162 = arith.select %24, %157, %161 : vector<8x128xi1>, vector<8x128xf32>
    %163 = vector.extract_strided_slice %162 {offsets = [0, 0], sizes = [8, 32], strides = [1, 1]} : vector<8x128xf32> to vector<8x32xf32>
    %164 = vector.extract_strided_slice %162 {offsets = [0, 32], sizes = [8, 32], strides = [1, 1]} : vector<8x128xf32> to vector<8x32xf32>
    %165 = vector.extract_strided_slice %162 {offsets = [0, 64], sizes = [8, 32], strides = [1, 1]} : vector<8x128xf32> to vector<8x32xf32>
    %166 = vector.extract_strided_slice %162 {offsets = [0, 96], sizes = [8, 32], strides = [1, 1]} : vector<8x128xf32> to vector<8x32xf32>
    %167 = arith.mulf %164, %126 : vector<8x32xf32>
    %168 = arith.mulf %163, %165 : vector<8x32xf32>
    %169 = arith.addf %167, %168 : vector<8x32xf32>
    %170 = math.tanh %169 : vector<8x32xf32>
    %171 = arith.mulf %166, %170 : vector<8x32xf32>
    %172 = arith.truncf %128 : vector<8x32xf32> to vector<8x32xbf16>
    %cst_44 = arith.constant dense<0.000000e+00> : vector<8x128xf32>
    %173 = tpu.matmul %172, %3, %cst_44 {dimension_numbers = #tpu.dot_dimension_numbers<[1], [0], [0], [1], [0, 0, 1, 1], [], []>} : vector<8x32xbf16>, vector<32x128xbf16>, vector<8x128xf32> -> vector<8x128xf32>
    %174 = arith.truncf %151 : vector<8x32xf32> to vector<8x32xbf16>
    %cst_45 = arith.constant dense<0.000000e+00> : vector<8x128xf32>
    %175 = tpu.matmul %174, %7, %cst_45 {dimension_numbers = #tpu.dot_dimension_numbers<[1], [0], [0], [1], [0, 0, 1, 1], [], []>} : vector<8x32xbf16>, vector<32x128xbf16>, vector<8x128xf32> -> vector<8x128xf32>
    %176 = arith.addf %173, %175 : vector<8x128xf32>
    %177 = vector.broadcast %9 : vector<1x128xf32> to vector<8x128xf32>
    %178 = arith.addf %176, %177 : vector<8x128xf32>
    %179 = arith.mulf %178, %36 : vector<8x128xf32>
    %180 = math.tanh %179 : vector<8x128xf32>
    %cst_46 = arith.constant 5.000000e-01 : f32
    %181 = vector.broadcast %cst_46 : f32 to vector<8x128xf32>
    %182 = arith.mulf %181, %180 : vector<8x128xf32>
    %cst_47 = arith.constant 5.000000e-01 : f32
    %183 = vector.broadcast %cst_47 : f32 to vector<8x128xf32>
    %184 = arith.addf %182, %183 : vector<8x128xf32>
    %185 = arith.select %33, %180, %184 : vector<8x128xi1>, vector<8x128xf32>
    %186 = vector.extract_strided_slice %185 {offsets = [0, 0], sizes = [8, 32], strides = [1, 1]} : vector<8x128xf32> to vector<8x32xf32>
    %187 = vector.extract_strided_slice %185 {offsets = [0, 32], sizes = [8, 32], strides = [1, 1]} : vector<8x128xf32> to vector<8x32xf32>
    %188 = vector.extract_strided_slice %185 {offsets = [0, 64], sizes = [8, 32], strides = [1, 1]} : vector<8x128xf32> to vector<8x32xf32>
    %189 = vector.extract_strided_slice %185 {offsets = [0, 96], sizes = [8, 32], strides = [1, 1]} : vector<8x128xf32> to vector<8x32xf32>
    %190 = arith.mulf %187, %149 : vector<8x32xf32>
    %191 = arith.mulf %186, %188 : vector<8x32xf32>
    %192 = arith.addf %190, %191 : vector<8x32xf32>
    %193 = math.tanh %192 : vector<8x32xf32>
    %194 = arith.mulf %189, %193 : vector<8x32xf32>
    %195 = vector.extract_strided_slice %41 {offsets = [32, 0], sizes = [8, 128], strides = [1, 1]} : vector<64x128xf32> to vector<8x128xf32>
    %196 = arith.truncf %171 : vector<8x32xf32> to vector<8x32xbf16>
    %cst_48 = arith.constant dense<0.000000e+00> : vector<8x128xf32>
    %197 = tpu.matmul %196, %5, %cst_48 {dimension_numbers = #tpu.dot_dimension_numbers<[1], [0], [0], [1], [0, 0, 1, 1], [], []>} : vector<8x32xbf16>, vector<32x128xbf16>, vector<8x128xf32> -> vector<8x128xf32>
    %198 = arith.addf %195, %197 : vector<8x128xf32>
    %199 = arith.mulf %198, %27 : vector<8x128xf32>
    %200 = math.tanh %199 : vector<8x128xf32>
    %cst_49 = arith.constant 5.000000e-01 : f32
    %201 = vector.broadcast %cst_49 : f32 to vector<8x128xf32>
    %202 = arith.mulf %201, %200 : vector<8x128xf32>
    %cst_50 = arith.constant 5.000000e-01 : f32
    %203 = vector.broadcast %cst_50 : f32 to vector<8x128xf32>
    %204 = arith.addf %202, %203 : vector<8x128xf32>
    %205 = arith.select %24, %200, %204 : vector<8x128xi1>, vector<8x128xf32>
    %206 = vector.extract_strided_slice %205 {offsets = [0, 0], sizes = [8, 32], strides = [1, 1]} : vector<8x128xf32> to vector<8x32xf32>
    %207 = vector.extract_strided_slice %205 {offsets = [0, 32], sizes = [8, 32], strides = [1, 1]} : vector<8x128xf32> to vector<8x32xf32>
    %208 = vector.extract_strided_slice %205 {offsets = [0, 64], sizes = [8, 32], strides = [1, 1]} : vector<8x128xf32> to vector<8x32xf32>
    %209 = vector.extract_strided_slice %205 {offsets = [0, 96], sizes = [8, 32], strides = [1, 1]} : vector<8x128xf32> to vector<8x32xf32>
    %210 = arith.mulf %207, %169 : vector<8x32xf32>
    %211 = arith.mulf %206, %208 : vector<8x32xf32>
    %212 = arith.addf %210, %211 : vector<8x32xf32>
    %213 = math.tanh %212 : vector<8x32xf32>
    %214 = arith.mulf %209, %213 : vector<8x32xf32>
    %215 = arith.truncf %171 : vector<8x32xf32> to vector<8x32xbf16>
    %cst_51 = arith.constant dense<0.000000e+00> : vector<8x128xf32>
    %216 = tpu.matmul %215, %3, %cst_51 {dimension_numbers = #tpu.dot_dimension_numbers<[1], [0], [0], [1], [0, 0, 1, 1], [], []>} : vector<8x32xbf16>, vector<32x128xbf16>, vector<8x128xf32> -> vector<8x128xf32>
    %217 = arith.truncf %194 : vector<8x32xf32> to vector<8x32xbf16>
    %cst_52 = arith.constant dense<0.000000e+00> : vector<8x128xf32>
    %218 = tpu.matmul %217, %7, %cst_52 {dimension_numbers = #tpu.dot_dimension_numbers<[1], [0], [0], [1], [0, 0, 1, 1], [], []>} : vector<8x32xbf16>, vector<32x128xbf16>, vector<8x128xf32> -> vector<8x128xf32>
    %219 = arith.addf %216, %218 : vector<8x128xf32>
    %220 = vector.broadcast %9 : vector<1x128xf32> to vector<8x128xf32>
    %221 = arith.addf %219, %220 : vector<8x128xf32>
    %222 = arith.mulf %221, %36 : vector<8x128xf32>
    %223 = math.tanh %222 : vector<8x128xf32>
    %cst_53 = arith.constant 5.000000e-01 : f32
    %224 = vector.broadcast %cst_53 : f32 to vector<8x128xf32>
    %225 = arith.mulf %224, %223 : vector<8x128xf32>
    %cst_54 = arith.constant 5.000000e-01 : f32
    %226 = vector.broadcast %cst_54 : f32 to vector<8x128xf32>
    %227 = arith.addf %225, %226 : vector<8x128xf32>
    %228 = arith.select %33, %223, %227 : vector<8x128xi1>, vector<8x128xf32>
    %229 = vector.extract_strided_slice %228 {offsets = [0, 0], sizes = [8, 32], strides = [1, 1]} : vector<8x128xf32> to vector<8x32xf32>
    %230 = vector.extract_strided_slice %228 {offsets = [0, 32], sizes = [8, 32], strides = [1, 1]} : vector<8x128xf32> to vector<8x32xf32>
    %231 = vector.extract_strided_slice %228 {offsets = [0, 64], sizes = [8, 32], strides = [1, 1]} : vector<8x128xf32> to vector<8x32xf32>
    %232 = vector.extract_strided_slice %228 {offsets = [0, 96], sizes = [8, 32], strides = [1, 1]} : vector<8x128xf32> to vector<8x32xf32>
    %233 = arith.mulf %230, %192 : vector<8x32xf32>
    %234 = arith.mulf %229, %231 : vector<8x32xf32>
    %235 = arith.addf %233, %234 : vector<8x32xf32>
    %236 = math.tanh %235 : vector<8x32xf32>
    %237 = arith.mulf %232, %236 : vector<8x32xf32>
    %238 = vector.extract_strided_slice %41 {offsets = [40, 0], sizes = [8, 128], strides = [1, 1]} : vector<64x128xf32> to vector<8x128xf32>
    %239 = arith.truncf %214 : vector<8x32xf32> to vector<8x32xbf16>
    %cst_55 = arith.constant dense<0.000000e+00> : vector<8x128xf32>
    %240 = tpu.matmul %239, %5, %cst_55 {dimension_numbers = #tpu.dot_dimension_numbers<[1], [0], [0], [1], [0, 0, 1, 1], [], []>} : vector<8x32xbf16>, vector<32x128xbf16>, vector<8x128xf32> -> vector<8x128xf32>
    %241 = arith.addf %238, %240 : vector<8x128xf32>
    %242 = arith.mulf %241, %27 : vector<8x128xf32>
    %243 = math.tanh %242 : vector<8x128xf32>
    %cst_56 = arith.constant 5.000000e-01 : f32
    %244 = vector.broadcast %cst_56 : f32 to vector<8x128xf32>
    %245 = arith.mulf %244, %243 : vector<8x128xf32>
    %cst_57 = arith.constant 5.000000e-01 : f32
    %246 = vector.broadcast %cst_57 : f32 to vector<8x128xf32>
    %247 = arith.addf %245, %246 : vector<8x128xf32>
    %248 = arith.select %24, %243, %247 : vector<8x128xi1>, vector<8x128xf32>
    %249 = vector.extract_strided_slice %248 {offsets = [0, 0], sizes = [8, 32], strides = [1, 1]} : vector<8x128xf32> to vector<8x32xf32>
    %250 = vector.extract_strided_slice %248 {offsets = [0, 32], sizes = [8, 32], strides = [1, 1]} : vector<8x128xf32> to vector<8x32xf32>
    %251 = vector.extract_strided_slice %248 {offsets = [0, 64], sizes = [8, 32], strides = [1, 1]} : vector<8x128xf32> to vector<8x32xf32>
    %252 = vector.extract_strided_slice %248 {offsets = [0, 96], sizes = [8, 32], strides = [1, 1]} : vector<8x128xf32> to vector<8x32xf32>
    %253 = arith.mulf %250, %212 : vector<8x32xf32>
    %254 = arith.mulf %249, %251 : vector<8x32xf32>
    %255 = arith.addf %253, %254 : vector<8x32xf32>
    %256 = math.tanh %255 : vector<8x32xf32>
    %257 = arith.mulf %252, %256 : vector<8x32xf32>
    %258 = arith.truncf %214 : vector<8x32xf32> to vector<8x32xbf16>
    %cst_58 = arith.constant dense<0.000000e+00> : vector<8x128xf32>
    %259 = tpu.matmul %258, %3, %cst_58 {dimension_numbers = #tpu.dot_dimension_numbers<[1], [0], [0], [1], [0, 0, 1, 1], [], []>} : vector<8x32xbf16>, vector<32x128xbf16>, vector<8x128xf32> -> vector<8x128xf32>
    %260 = arith.truncf %237 : vector<8x32xf32> to vector<8x32xbf16>
    %cst_59 = arith.constant dense<0.000000e+00> : vector<8x128xf32>
    %261 = tpu.matmul %260, %7, %cst_59 {dimension_numbers = #tpu.dot_dimension_numbers<[1], [0], [0], [1], [0, 0, 1, 1], [], []>} : vector<8x32xbf16>, vector<32x128xbf16>, vector<8x128xf32> -> vector<8x128xf32>
    %262 = arith.addf %259, %261 : vector<8x128xf32>
    %263 = vector.broadcast %9 : vector<1x128xf32> to vector<8x128xf32>
    %264 = arith.addf %262, %263 : vector<8x128xf32>
    %265 = arith.mulf %264, %36 : vector<8x128xf32>
    %266 = math.tanh %265 : vector<8x128xf32>
    %cst_60 = arith.constant 5.000000e-01 : f32
    %267 = vector.broadcast %cst_60 : f32 to vector<8x128xf32>
    %268 = arith.mulf %267, %266 : vector<8x128xf32>
    %cst_61 = arith.constant 5.000000e-01 : f32
    %269 = vector.broadcast %cst_61 : f32 to vector<8x128xf32>
    %270 = arith.addf %268, %269 : vector<8x128xf32>
    %271 = arith.select %33, %266, %270 : vector<8x128xi1>, vector<8x128xf32>
    %272 = vector.extract_strided_slice %271 {offsets = [0, 0], sizes = [8, 32], strides = [1, 1]} : vector<8x128xf32> to vector<8x32xf32>
    %273 = vector.extract_strided_slice %271 {offsets = [0, 32], sizes = [8, 32], strides = [1, 1]} : vector<8x128xf32> to vector<8x32xf32>
    %274 = vector.extract_strided_slice %271 {offsets = [0, 64], sizes = [8, 32], strides = [1, 1]} : vector<8x128xf32> to vector<8x32xf32>
    %275 = vector.extract_strided_slice %271 {offsets = [0, 96], sizes = [8, 32], strides = [1, 1]} : vector<8x128xf32> to vector<8x32xf32>
    %276 = arith.mulf %273, %235 : vector<8x32xf32>
    %277 = arith.mulf %272, %274 : vector<8x32xf32>
    %278 = arith.addf %276, %277 : vector<8x32xf32>
    %279 = math.tanh %278 : vector<8x32xf32>
    %280 = arith.mulf %275, %279 : vector<8x32xf32>
    %281 = vector.extract_strided_slice %41 {offsets = [48, 0], sizes = [8, 128], strides = [1, 1]} : vector<64x128xf32> to vector<8x128xf32>
    %282 = arith.truncf %257 : vector<8x32xf32> to vector<8x32xbf16>
    %cst_62 = arith.constant dense<0.000000e+00> : vector<8x128xf32>
    %283 = tpu.matmul %282, %5, %cst_62 {dimension_numbers = #tpu.dot_dimension_numbers<[1], [0], [0], [1], [0, 0, 1, 1], [], []>} : vector<8x32xbf16>, vector<32x128xbf16>, vector<8x128xf32> -> vector<8x128xf32>
    %284 = arith.addf %281, %283 : vector<8x128xf32>
    %285 = arith.mulf %284, %27 : vector<8x128xf32>
    %286 = math.tanh %285 : vector<8x128xf32>
    %cst_63 = arith.constant 5.000000e-01 : f32
    %287 = vector.broadcast %cst_63 : f32 to vector<8x128xf32>
    %288 = arith.mulf %287, %286 : vector<8x128xf32>
    %cst_64 = arith.constant 5.000000e-01 : f32
    %289 = vector.broadcast %cst_64 : f32 to vector<8x128xf32>
    %290 = arith.addf %288, %289 : vector<8x128xf32>
    %291 = arith.select %24, %286, %290 : vector<8x128xi1>, vector<8x128xf32>
    %292 = vector.extract_strided_slice %291 {offsets = [0, 0], sizes = [8, 32], strides = [1, 1]} : vector<8x128xf32> to vector<8x32xf32>
    %293 = vector.extract_strided_slice %291 {offsets = [0, 32], sizes = [8, 32], strides = [1, 1]} : vector<8x128xf32> to vector<8x32xf32>
    %294 = vector.extract_strided_slice %291 {offsets = [0, 64], sizes = [8, 32], strides = [1, 1]} : vector<8x128xf32> to vector<8x32xf32>
    %295 = vector.extract_strided_slice %291 {offsets = [0, 96], sizes = [8, 32], strides = [1, 1]} : vector<8x128xf32> to vector<8x32xf32>
    %296 = arith.mulf %293, %255 : vector<8x32xf32>
    %297 = arith.mulf %292, %294 : vector<8x32xf32>
    %298 = arith.addf %296, %297 : vector<8x32xf32>
    %299 = math.tanh %298 : vector<8x32xf32>
    %300 = arith.mulf %295, %299 : vector<8x32xf32>
    %301 = arith.truncf %257 : vector<8x32xf32> to vector<8x32xbf16>
    %cst_65 = arith.constant dense<0.000000e+00> : vector<8x128xf32>
    %302 = tpu.matmul %301, %3, %cst_65 {dimension_numbers = #tpu.dot_dimension_numbers<[1], [0], [0], [1], [0, 0, 1, 1], [], []>} : vector<8x32xbf16>, vector<32x128xbf16>, vector<8x128xf32> -> vector<8x128xf32>
    %303 = arith.truncf %280 : vector<8x32xf32> to vector<8x32xbf16>
    %cst_66 = arith.constant dense<0.000000e+00> : vector<8x128xf32>
    %304 = tpu.matmul %303, %7, %cst_66 {dimension_numbers = #tpu.dot_dimension_numbers<[1], [0], [0], [1], [0, 0, 1, 1], [], []>} : vector<8x32xbf16>, vector<32x128xbf16>, vector<8x128xf32> -> vector<8x128xf32>
    %305 = arith.addf %302, %304 : vector<8x128xf32>
    %306 = vector.broadcast %9 : vector<1x128xf32> to vector<8x128xf32>
    %307 = arith.addf %305, %306 : vector<8x128xf32>
    %308 = arith.mulf %307, %36 : vector<8x128xf32>
    %309 = math.tanh %308 : vector<8x128xf32>
    %cst_67 = arith.constant 5.000000e-01 : f32
    %310 = vector.broadcast %cst_67 : f32 to vector<8x128xf32>
    %311 = arith.mulf %310, %309 : vector<8x128xf32>
    %cst_68 = arith.constant 5.000000e-01 : f32
    %312 = vector.broadcast %cst_68 : f32 to vector<8x128xf32>
    %313 = arith.addf %311, %312 : vector<8x128xf32>
    %314 = arith.select %33, %309, %313 : vector<8x128xi1>, vector<8x128xf32>
    %315 = vector.extract_strided_slice %314 {offsets = [0, 0], sizes = [8, 32], strides = [1, 1]} : vector<8x128xf32> to vector<8x32xf32>
    %316 = vector.extract_strided_slice %314 {offsets = [0, 32], sizes = [8, 32], strides = [1, 1]} : vector<8x128xf32> to vector<8x32xf32>
    %317 = vector.extract_strided_slice %314 {offsets = [0, 64], sizes = [8, 32], strides = [1, 1]} : vector<8x128xf32> to vector<8x32xf32>
    %318 = vector.extract_strided_slice %314 {offsets = [0, 96], sizes = [8, 32], strides = [1, 1]} : vector<8x128xf32> to vector<8x32xf32>
    %319 = arith.mulf %316, %278 : vector<8x32xf32>
    %320 = arith.mulf %315, %317 : vector<8x32xf32>
    %321 = arith.addf %319, %320 : vector<8x32xf32>
    %322 = math.tanh %321 : vector<8x32xf32>
    %323 = arith.mulf %318, %322 : vector<8x32xf32>
    %324 = vector.extract_strided_slice %41 {offsets = [56, 0], sizes = [8, 128], strides = [1, 1]} : vector<64x128xf32> to vector<8x128xf32>
    %325 = arith.truncf %300 : vector<8x32xf32> to vector<8x32xbf16>
    %cst_69 = arith.constant dense<0.000000e+00> : vector<8x128xf32>
    %326 = tpu.matmul %325, %5, %cst_69 {dimension_numbers = #tpu.dot_dimension_numbers<[1], [0], [0], [1], [0, 0, 1, 1], [], []>} : vector<8x32xbf16>, vector<32x128xbf16>, vector<8x128xf32> -> vector<8x128xf32>
    %327 = arith.addf %324, %326 : vector<8x128xf32>
    %328 = arith.mulf %327, %27 : vector<8x128xf32>
    %329 = math.tanh %328 : vector<8x128xf32>
    %cst_70 = arith.constant 5.000000e-01 : f32
    %330 = vector.broadcast %cst_70 : f32 to vector<8x128xf32>
    %331 = arith.mulf %330, %329 : vector<8x128xf32>
    %cst_71 = arith.constant 5.000000e-01 : f32
    %332 = vector.broadcast %cst_71 : f32 to vector<8x128xf32>
    %333 = arith.addf %331, %332 : vector<8x128xf32>
    %334 = arith.select %24, %329, %333 : vector<8x128xi1>, vector<8x128xf32>
    %335 = vector.extract_strided_slice %334 {offsets = [0, 0], sizes = [8, 32], strides = [1, 1]} : vector<8x128xf32> to vector<8x32xf32>
    %336 = vector.extract_strided_slice %334 {offsets = [0, 32], sizes = [8, 32], strides = [1, 1]} : vector<8x128xf32> to vector<8x32xf32>
    %337 = vector.extract_strided_slice %334 {offsets = [0, 64], sizes = [8, 32], strides = [1, 1]} : vector<8x128xf32> to vector<8x32xf32>
    %338 = vector.extract_strided_slice %334 {offsets = [0, 96], sizes = [8, 32], strides = [1, 1]} : vector<8x128xf32> to vector<8x32xf32>
    %339 = arith.mulf %336, %298 : vector<8x32xf32>
    %340 = arith.mulf %335, %337 : vector<8x32xf32>
    %341 = arith.addf %339, %340 : vector<8x32xf32>
    %342 = math.tanh %341 : vector<8x32xf32>
    %343 = arith.mulf %338, %342 : vector<8x32xf32>
    %344 = arith.truncf %300 : vector<8x32xf32> to vector<8x32xbf16>
    %cst_72 = arith.constant dense<0.000000e+00> : vector<8x128xf32>
    %345 = tpu.matmul %344, %3, %cst_72 {dimension_numbers = #tpu.dot_dimension_numbers<[1], [0], [0], [1], [0, 0, 1, 1], [], []>} : vector<8x32xbf16>, vector<32x128xbf16>, vector<8x128xf32> -> vector<8x128xf32>
    %346 = arith.truncf %323 : vector<8x32xf32> to vector<8x32xbf16>
    %cst_73 = arith.constant dense<0.000000e+00> : vector<8x128xf32>
    %347 = tpu.matmul %346, %7, %cst_73 {dimension_numbers = #tpu.dot_dimension_numbers<[1], [0], [0], [1], [0, 0, 1, 1], [], []>} : vector<8x32xbf16>, vector<32x128xbf16>, vector<8x128xf32> -> vector<8x128xf32>
    %348 = arith.addf %345, %347 : vector<8x128xf32>
    %349 = vector.broadcast %9 : vector<1x128xf32> to vector<8x128xf32>
    %350 = arith.addf %348, %349 : vector<8x128xf32>
    %351 = arith.mulf %350, %36 : vector<8x128xf32>
    %352 = math.tanh %351 : vector<8x128xf32>
    %cst_74 = arith.constant 5.000000e-01 : f32
    %353 = vector.broadcast %cst_74 : f32 to vector<8x128xf32>
    %354 = arith.mulf %353, %352 : vector<8x128xf32>
    %cst_75 = arith.constant 5.000000e-01 : f32
    %355 = vector.broadcast %cst_75 : f32 to vector<8x128xf32>
    %356 = arith.addf %354, %355 : vector<8x128xf32>
    %357 = arith.select %33, %352, %356 : vector<8x128xi1>, vector<8x128xf32>
    %358 = vector.extract_strided_slice %357 {offsets = [0, 0], sizes = [8, 32], strides = [1, 1]} : vector<8x128xf32> to vector<8x32xf32>
    %359 = vector.extract_strided_slice %357 {offsets = [0, 32], sizes = [8, 32], strides = [1, 1]} : vector<8x128xf32> to vector<8x32xf32>
    %360 = vector.extract_strided_slice %357 {offsets = [0, 64], sizes = [8, 32], strides = [1, 1]} : vector<8x128xf32> to vector<8x32xf32>
    %361 = vector.extract_strided_slice %357 {offsets = [0, 96], sizes = [8, 32], strides = [1, 1]} : vector<8x128xf32> to vector<8x32xf32>
    %362 = arith.mulf %359, %321 : vector<8x32xf32>
    %363 = arith.mulf %358, %360 : vector<8x32xf32>
    %364 = arith.addf %362, %363 : vector<8x32xf32>
    %365 = math.tanh %364 : vector<8x32xf32>
    %366 = arith.mulf %361, %365 : vector<8x32xf32>
    %367 = arith.truncf %343 : vector<8x32xf32> to vector<8x32xbf16>
    %cst_76 = arith.constant dense<0.000000e+00> : vector<8x128xf32>
    %368 = tpu.matmul %367, %3, %cst_76 {dimension_numbers = #tpu.dot_dimension_numbers<[1], [0], [0], [1], [0, 0, 1, 1], [], []>} : vector<8x32xbf16>, vector<32x128xbf16>, vector<8x128xf32> -> vector<8x128xf32>
    %369 = arith.truncf %366 : vector<8x32xf32> to vector<8x32xbf16>
    %cst_77 = arith.constant dense<0.000000e+00> : vector<8x128xf32>
    %370 = tpu.matmul %369, %7, %cst_77 {dimension_numbers = #tpu.dot_dimension_numbers<[1], [0], [0], [1], [0, 0, 1, 1], [], []>} : vector<8x32xbf16>, vector<32x128xbf16>, vector<8x128xf32> -> vector<8x128xf32>
    %371 = arith.addf %368, %370 : vector<8x128xf32>
    %372 = vector.broadcast %9 : vector<1x128xf32> to vector<8x128xf32>
    %373 = arith.addf %371, %372 : vector<8x128xf32>
    %374 = arith.mulf %373, %36 : vector<8x128xf32>
    %375 = math.tanh %374 : vector<8x128xf32>
    %cst_78 = arith.constant 5.000000e-01 : f32
    %376 = vector.broadcast %cst_78 : f32 to vector<8x128xf32>
    %377 = arith.mulf %376, %375 : vector<8x128xf32>
    %cst_79 = arith.constant 5.000000e-01 : f32
    %378 = vector.broadcast %cst_79 : f32 to vector<8x128xf32>
    %379 = arith.addf %377, %378 : vector<8x128xf32>
    %380 = arith.select %33, %375, %379 : vector<8x128xi1>, vector<8x128xf32>
    %381 = vector.extract_strided_slice %380 {offsets = [0, 0], sizes = [8, 32], strides = [1, 1]} : vector<8x128xf32> to vector<8x32xf32>
    %382 = vector.extract_strided_slice %380 {offsets = [0, 32], sizes = [8, 32], strides = [1, 1]} : vector<8x128xf32> to vector<8x32xf32>
    %383 = vector.extract_strided_slice %380 {offsets = [0, 64], sizes = [8, 32], strides = [1, 1]} : vector<8x128xf32> to vector<8x32xf32>
    %384 = vector.extract_strided_slice %380 {offsets = [0, 96], sizes = [8, 32], strides = [1, 1]} : vector<8x128xf32> to vector<8x32xf32>
    %385 = arith.mulf %382, %364 : vector<8x32xf32>
    %386 = arith.mulf %381, %383 : vector<8x32xf32>
    %387 = arith.addf %385, %386 : vector<8x32xf32>
    %388 = math.tanh %387 : vector<8x32xf32>
    %389 = arith.mulf %384, %388 : vector<8x32xf32>
    %390 = arith.truncf %389 : vector<8x32xf32> to vector<8x32xbf16>
    %cst_80 = arith.constant dense<0.000000e+00> : vector<8x64xf32>
    %391 = tpu.matmul %390, %11, %cst_80 {dimension_numbers = #tpu.dot_dimension_numbers<[1], [0], [0], [1], [0, 0, 1, 1], [], []>} : vector<8x32xbf16>, vector<32x64xbf16>, vector<8x64xf32> -> vector<8x64xf32>
    %392 = vector.broadcast %12 : vector<1x64xf32> to vector<8x64xf32>
    %393 = arith.addf %391, %392 : vector<8x64xf32>
    %cst_81 = arith.constant 0.000000e+00 : f32
    %394 = vector.broadcast %cst_81 : f32 to vector<8x64xf32>
    %395 = arith.maximumf %393, %394 : vector<8x64xf32>
    %396 = arith.truncf %395 : vector<8x64xf32> to vector<8x64xbf16>
    %cst_82 = arith.constant dense<0.000000e+00> : vector<8x32xf32>
    %397 = tpu.matmul %396, %14, %cst_82 {dimension_numbers = #tpu.dot_dimension_numbers<[1], [0], [0], [1], [0, 0, 1, 1], [], []>} : vector<8x64xbf16>, vector<64x32xbf16>, vector<8x32xf32> -> vector<8x32xf32>
    %398 = vector.broadcast %15 : vector<1x32xf32> to vector<8x32xf32>
    %399 = arith.addf %397, %398 : vector<8x32xf32>
    %cst_83 = arith.constant 0.000000e+00 : f32
    %400 = vector.broadcast %cst_83 : f32 to vector<8x32xf32>
    %401 = arith.maximumf %399, %400 : vector<8x32xf32>
    %402 = arith.truncf %401 : vector<8x32xf32> to vector<8x32xbf16>
    %cst_84 = arith.constant dense<0.000000e+00> : vector<8x1xf32>
    %403 = tpu.matmul %402, %17, %cst_84 {dimension_numbers = #tpu.dot_dimension_numbers<[1], [0], [0], [1], [0, 0, 1, 1], [], []>} : vector<8x32xbf16>, vector<32x1xbf16>, vector<8x1xf32> -> vector<8x1xf32>
    %404 = vector.broadcast %18 : vector<1x1xf32> to vector<8x1xf32>
    %405 = arith.addf %403, %404 : vector<8x1xf32>
    %c0_85 = arith.constant 0 : index
    %c0_86 = arith.constant 0 : index
    %406 = vector.load %arg2[%c0_85, %c0_86] : memref<8x1xf32, #tpu.memory_space<vmem>>, vector<8x1xf32>
    tpu.vector_store %arg2[%c0_85, %c0_86], %405 {strides = array<i32>} : memref<8x1xf32, #tpu.memory_space<vmem>>, vector<8x1xf32>,
    return
  }
}

</mosaic_0001>

<llo_original>
// kernel: forward.1
$region0: #{forward.1}
  #allocation0 [shape = 'u32[]', space=smem, size = 0x4, offset = 0x4, fixed_abs, tag = 'smem constant byte address 0x4 - core index']
  #allocation1 [shape = 'u32[144,128]{1,0:T(1,128)}', space=vmem, size = 0x12000, scoped, tag = 'internal scratch']
  %s0 = inlined_call_operand.vmem [shape: f32[64,4], index: 0, kind: input, shape index: {}]
  %s1 = inlined_call_operand.hbm [shape: f32[272,128], index: 1, kind: input, shape index: {}]
  %s2 = inlined_call_operand.vmem [shape: f32[8,1], index: 2, kind: output, shape index: {}]
  %s3 = sld [smem:[#allocation0]]
  $region22: #{forward.1} parent=0
    _
  %s5 = ssub.s32 1, %s3
  %s6 = scalar_select 0, %s5, %s3
  $region1: #{forward.1} parent=0
    #allocation2 [shape = 'u8[139264]{0}', space=vmem, size = 0x22000, scoped, tag = 'input window, operand 1, single buffered']
    #allocation3 [shape = 's32[1]{0}', space=sflag, size = 0x4, scoped, tag = 'scoped memory for forward.1']
    %7 = vsyncpa [#allocation3], 0
    // Predicated region
    $region2: #{forward.1} parent=1 // pred_check
      _
    $region3: #{forward.1} parent=1 // pred_check_branch
      %9 = sbr.rel (0) target = $region5
    $region4: #{forward.1} parent=1 // pred_region
      _
    $region5: #{forward.1} parent=1 // pred_fallthru
      _
    // Predicated region
    $region6: #{forward.1} parent=1 // pred_check
      _
    $region7: #{forward.1} parent=1 // pred_check_branch
      %11 = sbr.rel (0) target = $region9
    $region8: #{forward.1} parent=1 // pred_region
      %s13 = ssub.s32 4352, 4352
      %14 = vsyncadd [#allocation3], %s13
      %s15 = sshll.u32 [#allocation2], 4
      %s16 = int_to_ptr.vmem [resolvable:$true] %s15
      %21 = dma.hbm_to_vmem [thread:$0]  %s1, 4352, %s16, [#allocation3], 128, 128, 8
    $region9: #{forward.1} parent=1 // pred_fallthru
      _
    // Predicated region
    $region10: #{forward.1} parent=1 // pred_check
      _
    $region11: #{forward.1} parent=1 // pred_check_branch
      %23 = sbr.rel (0) target = $region13
    $region12: #{forward.1} parent=1 // pred_region
      %24 = dma.done [#allocation3], 4352
    $region13: #{forward.1} parent=1 // pred_fallthru
      _
    %v26 = vld [vmem:[#allocation2] sm:$0xf]
    %v27 = vpack.c.bf16 %v26, %v26
    %v28 = vld [vmem:[#allocation2 + $0x30] sm:$0xff]
    %v29 = vld [vmem:[#allocation2 + $0x38] sm:$0xff]
    %v30 = vld [vmem:[#allocation2 + $0x40] sm:$0xff]
    %v31 = vld [vmem:[#allocation2 + $0x48] sm:$0xff]
    %v32 = vpack.c.bf16 %v29, %v28
    %v33 = vpack.c.bf16 %v31, %v30
    %v34 = vld [vmem:[#allocation2 + $0x8] sm:$0xff]
    %v35 = vld [vmem:[#allocation2 + $0x10] sm:$0xff]
    %v36 = vld [vmem:[#allocation2 + $0x18] sm:$0xff]
    %v37 = vld [vmem:[#allocation2 + $0x20] sm:$0xff]
    %v38 = vpack.c.bf16 %v35, %v34
    %v39 = vpack.c.bf16 %v37, %v36
    %v40 = vld [vmem:[#allocation2 + $0x50] sm:$0xff]
    %v41 = vld [vmem:[#allocation2 + $0x58] sm:$0xff]
    %v42 = vld [vmem:[#allocation2 + $0x60] sm:$0xff]
    %v43 = vld [vmem:[#allocation2 + $0x68] sm:$0xff]
    %v44 = vpack.c.bf16 %v41, %v40
    %v45 = vpack.c.bf16 %v43, %v42
    %v46 = vld [vmem:[#allocation2 + $0x28] sm:$0x1]
    %v47 = vld [vmem:[#allocation2 + $0x70] sm:$0x1]
    %v48 = vld [vmem:[#allocation2 + $0x78] sm:$0xff]
    %v49 = vld [vmem:[#allocation2 + $0x80] sm:$0xff]
    %v50 = vld [vmem:[#allocation2 + $0x88] sm:$0xff]
    %v51 = vld [vmem:[#allocation2 + $0x90] sm:$0xff]
    %v52 = vpack.c.bf16 %v49, %v48
    %v53 = vpack.c.bf16 %v51, %v50
    %v54 = vld [vmem:[#allocation2 + $0x98] sm:$0x1]
    %v55 = vld [vmem:[#allocation2 + $0xa0] sm:$0xff]
    %v56 = vld [vmem:[#allocation2 + $0xa8] sm:$0xff]
    %v57 = vld [vmem:[#allocation2 + $0xb0] sm:$0xff]
    %v58 = vld [vmem:[#allocation2 + $0xb8] sm:$0xff]
    %v59 = vld [vmem:[#allocation2 + $0xc0] sm:$0xff]
    %v60 = vld [vmem:[#allocation2 + $0xc8] sm:$0xff]
    %v61 = vld [vmem:[#allocation2 + $0xd0] sm:$0xff]
    %v62 = vld [vmem:[#allocation2 + $0xd8] sm:$0xff]
    %v63 = vpack.c.bf16 %v56, %v55
    %v64 = vpack.c.bf16 %v58, %v57
    %v65 = vpack.c.bf16 %v60, %v59
    %v66 = vpack.c.bf16 %v62, %v61
    %v67 = vld [vmem:[#allocation2 + $0xe0] sm:$0x1]
    %v68 = vld [vmem:[#allocation2 + $0xe8] sm:$0xff]
    %v69 = vld [vmem:[#allocation2 + $0xf0] sm:$0xff]
    %v70 = vld [vmem:[#allocation2 + $0xf8] sm:$0xff]
    %v71 = vld [vmem:[#allocation2 + $0x100] sm:$0xff]
    %v72 = vpack.c.bf16 %v69, %v68
    %v73 = vpack.c.bf16 %v71, %v70
    %v74 = vld [vmem:[#allocation2 + $0x108] sm:$0x1]
    %v75 = vlaneseq
    %v76 = vand.u32 %v75, 127
    %vm77 = vcmp.ge.s32.totalorder %v76, 64
    %vm78 = vcmp.lt.s32.totalorder %v76, 96
    %vm79 = vmand %vm77, %vm78
    %v80 = vsel %vm79, 1.0, 0.5
    %v81 = vld [vmem:[%s0] sm:$0xff]
    %v82 = vld [vmem:[%s0 + $0x8] sm:$0xff]
    %v83 = vld [vmem:[%s0 + $0x10] sm:$0xff]
    %v84 = vld [vmem:[%s0 + $0x18] sm:$0xff]
    %v85 = vld [vmem:[%s0 + $0x20] sm:$0xff]
    %v86 = vld [vmem:[%s0 + $0x28] sm:$0xff]
    %v87 = vld [vmem:[%s0 + $0x30] sm:$0xff]
    %v88 = vld [vmem:[%s0 + $0x38] sm:$0xff]
    %v89 = vpack.c.bf16 %v82, %v81
    %v90 = vpack.c.bf16 %v84, %v83
    %v91 = vpack.c.bf16 %v86, %v85
    %v92 = vpack.c.bf16 %v88, %v87
    %v93 = vlaneseq
    %v94 = vshrl.u32 %v93, 7
    %v95 = vsub.s32 0, %v94
    %v96 = vrot.slane %v46, %v95
    %vm97 = vcmask 31744
    %v99 = vsel %vm97, %v89, 0
    %v102 = vsel %vm97, %v90, 0
    %v105 = vsel %vm97, %v91, 0
    %v108 = vsel %vm97, %v92, 0
    %vm110 = vcmask 1041408
    %v112 = vsel %vm110, %v27, 0
    %114 = vmatprep.subr.bf16.mxu0 0
    %115 = vmatpush1.bf16.msra.mxu0 0
    %116 = vmatprep.subr.bf16.mxu0 0
    %117 = vmatpush1.bf16.msra.mxu0 0
    %118 = vmatprep.subr.bf16.mxu0 0
    %119 = vmatpush1.bf16.msra.mxu0 0
    %120 = vmatprep.subr.bf16.mxu0 0
    %121 = vmatpush1.bf16.msra.mxu0 0
    %122 = vmatprep.subr.bf16.mxu0 0
    %123 = vmatpush1.bf16.msra.mxu0 0
    %124 = vmatprep.subr.bf16.mxu0 0
    %125 = vmatpush1.bf16.msra.mxu0 0
    %126 = vmatprep.subr.bf16.mxu0 0
    %127 = vmatpush1.bf16.msra.mxu0 0
    %128 = vmatprep.subr.bf16.mxu0 0
    %129 = vmatpush1.bf16.msra.mxu0 %v112
    %130 = vmatprep.subr.bf16.mxu0 0
    %131 = vmatpush2.bf16.msra.mxu0 0
    %132 = vmatprep.subr.bf16.mxu0 0
    %133 = vmatpush2.bf16.msra.mxu0 0
    %134 = vmatprep.subr.bf16.mxu0 0
    %135 = vmatpush2.bf16.msra.mxu0 0
    %136 = vmatprep.subr.bf16.mxu0 0
    %137 = vmatpush2.bf16.msra.mxu0 0
    %138 = vmatprep.subr.bf16.mxu0 0
    %139 = vmatpush2.bf16.msra.mxu0 0
    %140 = vmatprep.subr.bf16.mxu0 0
    %141 = vmatpush2.bf16.msra.mxu0 0
    %142 = vmatprep.subr.bf16.mxu0 0
    %143 = vmatpush2.bf16.msra.mxu0 0
    %144 = vmatprep.subr.bf16.mxu0 0
    %145 = vmatpush2.bf16.msra.mxu0 0
    %146 = vmatprep.mubr.bf16.mxu0 0
    %147 = vmatmul.mubr.bf16.gmra.mxu0 %v99
    %v148 = vpop.f32.mrf.mxu0
    %v149 = vadd.f32 %v96, %v148
    %v150 = vpop.f32.mrf.mxu0
    %v151 = vpop.f32.mrf.mxu0
    %v152 = vadd.f32 %v96, %v151
    %v153 = vpop.f32.mrf.mxu0
    %154 = vmatprep.mubr.bf16.mxu0 0
    %155 = vmatmul.mubr.bf16.gmra.mxu0 %v102
    %v156 = vpop.f32.mrf.mxu0
    %v157 = vadd.f32 %v96, %v156
    %v158 = vpop.f32.mrf.mxu0
    %v159 = vpop.f32.mrf.mxu0
    %v160 = vadd.f32 %v96, %v159
    %v161 = vpop.f32.mrf.mxu0
    %162 = vmatprep.mubr.bf16.mxu0 0
    %163 = vmatmul.mubr.bf16.gmra.mxu0 %v105
    %v164 = vpop.f32.mrf.mxu0
    %v165 = vadd.f32 %v96, %v164
    %v166 = vpop.f32.mrf.mxu0
    %v167 = vpop.f32.mrf.mxu0
    %v168 = vadd.f32 %v96, %v167
    %v169 = vpop.f32.mrf.mxu0
    %170 = vmatprep.mubr.bf16.mxu0 0
    %171 = vmatmul.mubr.bf16.gmra.mxu0 %v108
    %v172 = vpop.f32.mrf.mxu0
    %v173 = vadd.f32 %v96, %v172
    %v174 = vpop.f32.mrf.mxu0
    %v175 = vpop.f32.mrf.mxu0
    %v176 = vadd.f32 %v96, %v175
    %v177 = vpop.f32.mrf.mxu0
    %178 = vdwg.mxu0
    %vm179 = vcmask 261120
    %v181 = vsel %vm179, 0, 0
    %183 = vmatprep.subr.bf16.mxu0 0
    %184 = vmatpush1.bf16.msra.mxu0 0
    %185 = vmatprep.subr.bf16.mxu0 0
    %186 = vmatpush1.bf16.msra.mxu0 0
    %187 = vmatprep.subr.bf16.mxu0 0
    %188 = vmatpush1.bf16.msra.mxu0 0
    %189 = vmatprep.subr.bf16.mxu0 0
    %190 = vmatpush1.bf16.msra.mxu0 0
    %191 = vmatprep.subr.bf16.mxu0 0
    %192 = vmatpush1.bf16.msra.mxu0 0
    %193 = vmatprep.subr.bf16.mxu0 0
    %194 = vmatpush1.bf16.msra.mxu0 0
    %195 = vmatprep.subr.bf16.mxu0 0
    %196 = vmatpush1.bf16.msra.mxu0 %v39
    %197 = vmatprep.subr.bf16.mxu0 0
    %198 = vmatpush1.bf16.msra.mxu0 %v38
    %199 = vmatprep.subr.bf16.mxu0 0
    %200 = vmatpush2.bf16.msra.mxu0 0
    %201 = vmatprep.subr.bf16.mxu0 0
    %202 = vmatpush2.bf16.msra.mxu0 0
    %203 = vmatprep.subr.bf16.mxu0 0
    %204 = vmatpush2.bf16.msra.mxu0 0
    %205 = vmatprep.subr.bf16.mxu0 0
    %206 = vmatpush2.bf16.msra.mxu0 0
    %207 = vmatprep.subr.bf16.mxu0 0
    %208 = vmatpush2.bf16.msra.mxu0 0
    %209 = vmatprep.subr.bf16.mxu0 0
    %210 = vmatpush2.bf16.msra.mxu0 0
    %211 = vmatprep.subr.bf16.mxu0 0
    %212 = vmatpush2.bf16.msra.mxu0 0
    %213 = vmatprep.subr.bf16.mxu0 0
    %214 = vmatpush2.bf16.msra.mxu0 0
    %215 = vmatprep.mubr.bf16.mxu0 0
    %216 = vmatmul.mubr.bf16.gmra.mxu0 %v181
    %v217 = vpop.f32.mrf.mxu0
    %v218 = vadd.f32 0.0, %v217
    %v219 = vpop.f32.mrf.mxu0
    %v220 = vpop.f32.mrf.mxu0
    %v221 = vpop.f32.mrf.mxu0
    %222 = vdwg.mxu0
    %v223 = vadd.f32 %v149, %v218
    %v224 = vmul.f32 %v223, %v80
    %v225 = vtanh.pop %v224
    %v226 = vmul.f32 %v225, 0.5
    %v227 = vadd.f32 %v226, 0.5
    %v228 = vsel %vm79, %v225, %v227
    %v229 = vmul.f32 %v228, 0.0
    %231 = vrot.lane.b32.xlu0 %v228, 64
    %v232 = vpop.permute.xlu0 %231
    %v234 = vmul.f32 %v228, %v232
    %236 = vrot.lane.b32.xlu0 %v234, 32
    %v237 = vpop.permute.xlu0 %236
    %v239 = vadd.f32 %v229, %v237
    %v240 = vtanh.pop %v239
    %242 = vrot.lane.b32.xlu0 %v240, 64
    %v243 = vpop.permute.xlu0 %242
    %v245 = vmul.f32 %v228, %v243
    %v246 = vpack.c.bf16 %v245, %v245
    %248 = vrot.lane.b32.xlu0 %v246, 32
    %v249 = vpop.permute.xlu0 %248
    %v251 = vsel %vm179, %v249, 0
    %253 = vmatprep.subr.bf16.mxu0 0
    %254 = vmatpush1.bf16.msra.mxu0 0
    %255 = vmatprep.subr.bf16.mxu0 0
    %256 = vmatpush1.bf16.msra.mxu0 0
    %257 = vmatprep.subr.bf16.mxu0 0
    %258 = vmatpush1.bf16.msra.mxu0 0
    %259 = vmatprep.subr.bf16.mxu0 0
    %260 = vmatpush1.bf16.msra.mxu0 0
    %261 = vmatprep.subr.bf16.mxu0 0
    %262 = vmatpush1.bf16.msra.mxu0 0
    %263 = vmatprep.subr.bf16.mxu0 0
    %264 = vmatpush1.bf16.msra.mxu0 0
    %265 = vmatprep.subr.bf16.mxu0 0
    %266 = vmatpush1.bf16.msra.mxu0 %v39
    %267 = vmatprep.subr.bf16.mxu0 0
    %268 = vmatpush1.bf16.msra.mxu0 %v38
    %269 = vmatprep.subr.bf16.mxu0 0
    %270 = vmatpush2.bf16.msra.mxu0 0
    %271 = vmatprep.subr.bf16.mxu0 0
    %272 = vmatpush2.bf16.msra.mxu0 0
    %273 = vmatprep.subr.bf16.mxu0 0
    %274 = vmatpush2.bf16.msra.mxu0 0
    %275 = vmatprep.subr.bf16.mxu0 0
    %276 = vmatpush2.bf16.msra.mxu0 0
    %277 = vmatprep.subr.bf16.mxu0 0
    %278 = vmatpush2.bf16.msra.mxu0 0
    %279 = vmatprep.subr.bf16.mxu0 0
    %280 = vmatpush2.bf16.msra.mxu0 0
    %281 = vmatprep.subr.bf16.mxu0 0
    %282 = vmatpush2.bf16.msra.mxu0 0
    %283 = vmatprep.subr.bf16.mxu0 0
    %284 = vmatpush2.bf16.msra.mxu0 0
    %285 = vmatprep.mubr.bf16.mxu0 0
    %286 = vmatmul.mubr.bf16.gmra.mxu0 %v251
    %v287 = vpop.f32.mrf.mxu0
    %v288 = vadd.f32 0.0, %v287
    %v289 = vpop.f32.mrf.mxu0
    %v290 = vpop.f32.mrf.mxu0
    %v291 = vpop.f32.mrf.mxu0
    %292 = vdwg.mxu0
    %v293 = vadd.f32 %v152, %v288
    %v294 = vmul.f32 %v293, %v80
    %v295 = vtanh.pop %v294
    %v296 = vmul.f32 %v295, 0.5
    %v297 = vadd.f32 %v296, 0.5
    %v298 = vsel %vm79, %v295, %v297
    %v299 = vmul.f32 %v298, %v239
    %301 = vrot.lane.b32.xlu0 %v298, 64
    %v302 = vpop.permute.xlu0 %301
    %v304 = vmul.f32 %v298, %v302
    %306 = vrot.lane.b32.xlu0 %v304, 32
    %v307 = vpop.permute.xlu0 %306
    %v309 = vadd.f32 %v299, %v307
    %v310 = vtanh.pop %v309
    %312 = vrot.lane.b32.xlu0 %v310, 64
    %v313 = vpop.permute.xlu0 %312
    %v315 = vmul.f32 %v298, %v313
    %316 = vmatprep.subr.bf16.mxu0 0
    %317 = vmatpush1.bf16.msra.mxu0 0
    %318 = vmatprep.subr.bf16.mxu0 0
    %319 = vmatpush1.bf16.msra.mxu0 0
    %320 = vmatprep.subr.bf16.mxu0 0
    %321 = vmatpush1.bf16.msra.mxu0 0
    %322 = vmatprep.subr.bf16.mxu0 0
    %323 = vmatpush1.bf16.msra.mxu0 0
    %324 = vmatprep.subr.bf16.mxu0 0
    %325 = vmatpush1.bf16.msra.mxu0 0
    %326 = vmatprep.subr.bf16.mxu0 0
    %327 = vmatpush1.bf16.msra.mxu0 0
    %328 = vmatprep.subr.bf16.mxu0 0
    %329 = vmatpush1.bf16.msra.mxu0 %v45
    %330 = vmatprep.subr.bf16.mxu0 0
    %331 = vmatpush1.bf16.msra.mxu0 %v44
    %332 = vmatprep.subr.bf16.mxu0 0
    %333 = vmatpush2.bf16.msra.mxu0 0
    %334 = vmatprep.subr.bf16.mxu0 0
    %335 = vmatpush2.bf16.msra.mxu0 0
    %336 = vmatprep.subr.bf16.mxu0 0
    %337 = vmatpush2.bf16.msra.mxu0 0
    %338 = vmatprep.subr.bf16.mxu0 0
    %339 = vmatpush2.bf16.msra.mxu0 0
    %340 = vmatprep.subr.bf16.mxu0 0
    %341 = vmatpush2.bf16.msra.mxu0 0
    %342 = vmatprep.subr.bf16.mxu0 0
    %343 = vmatpush2.bf16.msra.mxu0 0
    %344 = vmatprep.subr.bf16.mxu0 0
    %345 = vmatpush2.bf16.msra.mxu0 0
    %346 = vmatprep.subr.bf16.mxu0 0
    %347 = vmatpush2.bf16.msra.mxu0 0
    %348 = vmatprep.mubr.bf16.mxu0 0
    %349 = vmatmul.mubr.bf16.gmra.mxu0 %v181
    %v350 = vpop.f32.mrf.mxu0
    %v351 = vadd.f32 0.0, %v350
    %v352 = vpop.f32.mrf.mxu0
    %v353 = vpop.f32.mrf.mxu0
    %v354 = vpop.f32.mrf.mxu0
    %355 = vdwg.mxu0
    %356 = vmatprep.subr.bf16.mxu0 0
    %357 = vmatpush1.bf16.msra.mxu0 0
    %358 = vmatprep.subr.bf16.mxu0 0
    %359 = vmatpush1.bf16.msra.mxu0 0
    %360 = vmatprep.subr.bf16.mxu0 0
    %361 = vmatpush1.bf16.msra.mxu0 0
    %362 = vmatprep.subr.bf16.mxu0 0
    %363 = vmatpush1.bf16.msra.mxu0 0
    %364 = vmatprep.subr.bf16.mxu0 0
    %365 = vmatpush1.bf16.msra.mxu0 0
    %366 = vmatprep.subr.bf16.mxu0 0
    %367 = vmatpush1.bf16.msra.mxu0 0
    %368 = vmatprep.subr.bf16.mxu0 0
    %369 = vmatpush1.bf16.msra.mxu0 %v33
    %370 = vmatprep.subr.bf16.mxu0 0
    %371 = vmatpush1.bf16.msra.mxu0 %v32
    %372 = vmatprep.subr.bf16.mxu0 0
    %373 = vmatpush2.bf16.msra.mxu0 0
    %374 = vmatprep.subr.bf16.mxu0 0
    %375 = vmatpush2.bf16.msra.mxu0 0
    %376 = vmatprep.subr.bf16.mxu0 0
    %377 = vmatpush2.bf16.msra.mxu0 0
    %378 = vmatprep.subr.bf16.mxu0 0
    %379 = vmatpush2.bf16.msra.mxu0 0
    %380 = vmatprep.subr.bf16.mxu0 0
    %381 = vmatpush2.bf16.msra.mxu0 0
    %382 = vmatprep.subr.bf16.mxu0 0
    %383 = vmatpush2.bf16.msra.mxu0 0
    %384 = vmatprep.subr.bf16.mxu0 0
    %385 = vmatpush2.bf16.msra.mxu0 0
    %386 = vmatprep.subr.bf16.mxu0 0
    %387 = vmatpush2.bf16.msra.mxu0 0
    %388 = vmatprep.mubr.bf16.mxu0 0
    %389 = vmatmul.mubr.bf16.gmra.mxu0 %v251
    %v390 = vpop.f32.mrf.mxu0
    %v391 = vadd.f32 %v351, %v390
    %v392 = vpop.f32.mrf.mxu0
    %v393 = vpop.f32.mrf.mxu0
    %v394 = vpop.f32.mrf.mxu0
    %395 = vdwg.mxu0
    %v396 = vlaneseq
    %v397 = vshrl.u32 %v396, 7
    %v398 = vsub.s32 0, %v397
    %v399 = vrot.slane %v47, %v398
    %v400 = vadd.f32 %v391, %v399
    %v401 = vmul.f32 %v400, %v80
    %v402 = vtanh.pop %v401
    %v403 = vmul.f32 %v402, 0.5
    %v404 = vadd.f32 %v403, 0.5
    %v405 = vsel %vm79, %v402, %v404
    %v406 = vmul.f32 %v405, 0.0
    %408 = vrot.lane.b32.xlu0 %v405, 64
    %v409 = vpop.permute.xlu0 %408
    %v411 = vmul.f32 %v405, %v409
    %413 = vrot.lane.b32.xlu0 %v411, 32
    %v414 = vpop.permute.xlu0 %413
    %v416 = vadd.f32 %v406, %v414
    %v417 = vtanh.pop %v416
    %419 = vrot.lane.b32.xlu0 %v417, 64
    %v420 = vpop.permute.xlu0 %419
    %v422 = vmul.f32 %v405, %v420
    %v423 = vpack.c.bf16 %v315, %v315
    %425 = vrot.lane.b32.xlu0 %v423, 32
    %v426 = vpop.permute.xlu0 %425
    %v428 = vsel %vm179, %v426, 0
    %430 = vmatprep.subr.bf16.mxu0 0
    %431 = vmatpush1.bf16.msra.mxu0 0
    %432 = vmatprep.subr.bf16.mxu0 0
    %433 = vmatpush1.bf16.msra.mxu0 0
    %434 = vmatprep.subr.bf16.mxu0 0
    %435 = vmatpush1.bf16.msra.mxu0 0
    %436 = vmatprep.subr.bf16.mxu0 0
    %437 = vmatpush1.bf16.msra.mxu0 0
    %438 = vmatprep.subr.bf16.mxu0 0
    %439 = vmatpush1.bf16.msra.mxu0 0
    %440 = vmatprep.subr.bf16.mxu0 0
    %441 = vmatpush1.bf16.msra.mxu0 0
    %442 = vmatprep.subr.bf16.mxu0 0
    %443 = vmatpush1.bf16.msra.mxu0 %v39
    %444 = vmatprep.subr.bf16.mxu0 0
    %445 = vmatpush1.bf16.msra.mxu0 %v38
    %446 = vmatprep.subr.bf16.mxu0 0
    %447 = vmatpush2.bf16.msra.mxu0 0
    %448 = vmatprep.subr.bf16.mxu0 0
    %449 = vmatpush2.bf16.msra.mxu0 0
    %450 = vmatprep.subr.bf16.mxu0 0
    %451 = vmatpush2.bf16.msra.mxu0 0
    %452 = vmatprep.subr.bf16.mxu0 0
    %453 = vmatpush2.bf16.msra.mxu0 0
    %454 = vmatprep.subr.bf16.mxu0 0
    %455 = vmatpush2.bf16.msra.mxu0 0
    %456 = vmatprep.subr.bf16.mxu0 0
    %457 = vmatpush2.bf16.msra.mxu0 0
    %458 = vmatprep.subr.bf16.mxu0 0
    %459 = vmatpush2.bf16.msra.mxu0 0
    %460 = vmatprep.subr.bf16.mxu0 0
    %461 = vmatpush2.bf16.msra.mxu0 0
    %462 = vmatprep.mubr.bf16.mxu0 0
    %463 = vmatmul.mubr.bf16.gmra.mxu0 %v428
    %v464 = vpop.f32.mrf.mxu0
    %v465 = vadd.f32 0.0, %v464
    %v466 = vpop.f32.mrf.mxu0
    %v467 = vpop.f32.mrf.mxu0
    %v468 = vpop.f32.mrf.mxu0
    %469 = vdwg.mxu0
    %v470 = vadd.f32 %v157, %v465
    %v471 = vmul.f32 %v470, %v80
    %v472 = vtanh.pop %v471
    %v473 = vmul.f32 %v472, 0.5
    %v474 = vadd.f32 %v473, 0.5
    %v475 = vsel %vm79, %v472, %v474
    %v476 = vmul.f32 %v475, %v309
    %478 = vrot.lane.b32.xlu0 %v475, 64
    %v479 = vpop.permute.xlu0 %478
    %v481 = vmul.f32 %v475, %v479
    %483 = vrot.lane.b32.xlu0 %v481, 32
    %v484 = vpop.permute.xlu0 %483
    %v486 = vadd.f32 %v476, %v484
    %v487 = vtanh.pop %v486
    %489 = vrot.lane.b32.xlu0 %v487, 64
    %v490 = vpop.permute.xlu0 %489
    %v492 = vmul.f32 %v475, %v490
    %v493 = vpack.c.bf16 %v422, %v422
    %495 = vrot.lane.b32.xlu0 %v493, 32
    %v496 = vpop.permute.xlu0 %495
    %v498 = vsel %vm179, %v496, 0
    %500 = vmatprep.subr.bf16.mxu0 0
    %501 = vmatpush1.bf16.msra.mxu0 0
    %502 = vmatprep.subr.bf16.mxu0 0
    %503 = vmatpush1.bf16.msra.mxu0 0
    %504 = vmatprep.subr.bf16.mxu0 0
    %505 = vmatpush1.bf16.msra.mxu0 0
    %506 = vmatprep.subr.bf16.mxu0 0
    %507 = vmatpush1.bf16.msra.mxu0 0
    %508 = vmatprep.subr.bf16.mxu0 0
    %509 = vmatpush1.bf16.msra.mxu0 0
    %510 = vmatprep.subr.bf16.mxu0 0
    %511 = vmatpush1.bf16.msra.mxu0 0
    %512 = vmatprep.subr.bf16.mxu0 0
    %513 = vmatpush1.bf16.msra.mxu0 %v45
    %514 = vmatprep.subr.bf16.mxu0 0
    %515 = vmatpush1.bf16.msra.mxu0 %v44
    %516 = vmatprep.subr.bf16.mxu0 0
    %517 = vmatpush2.bf16.msra.mxu0 0
    %518 = vmatprep.subr.bf16.mxu0 0
    %519 = vmatpush2.bf16.msra.mxu0 0
    %520 = vmatprep.subr.bf16.mxu0 0
    %521 = vmatpush2.bf16.msra.mxu0 0
    %522 = vmatprep.subr.bf16.mxu0 0
    %523 = vmatpush2.bf16.msra.mxu0 0
    %524 = vmatprep.subr.bf16.mxu0 0
    %525 = vmatpush2.bf16.msra.mxu0 0
    %526 = vmatprep.subr.bf16.mxu0 0
    %527 = vmatpush2.bf16.msra.mxu0 0
    %528 = vmatprep.subr.bf16.mxu0 0
    %529 = vmatpush2.bf16.msra.mxu0 0
    %530 = vmatprep.subr.bf16.mxu0 0
    %531 = vmatpush2.bf16.msra.mxu0 0
    %532 = vmatprep.mubr.bf16.mxu0 0
    %533 = vmatmul.mubr.bf16.gmra.mxu0 %v498
    %v534 = vpop.f32.mrf.mxu0
    %v535 = vadd.f32 0.0, %v534
    %v536 = vpop.f32.mrf.mxu0
    %v537 = vpop.f32.mrf.mxu0
    %v538 = vpop.f32.mrf.mxu0
    %539 = vdwg.mxu0
    %540 = vmatprep.subr.bf16.mxu0 0
    %541 = vmatpush1.bf16.msra.mxu0 0
    %542 = vmatprep.subr.bf16.mxu0 0
    %543 = vmatpush1.bf16.msra.mxu0 0
    %544 = vmatprep.subr.bf16.mxu0 0
    %545 = vmatpush1.bf16.msra.mxu0 0
    %546 = vmatprep.subr.bf16.mxu0 0
    %547 = vmatpush1.bf16.msra.mxu0 0
    %548 = vmatprep.subr.bf16.mxu0 0
    %549 = vmatpush1.bf16.msra.mxu0 0
    %550 = vmatprep.subr.bf16.mxu0 0
    %551 = vmatpush1.bf16.msra.mxu0 0
    %552 = vmatprep.subr.bf16.mxu0 0
    %553 = vmatpush1.bf16.msra.mxu0 %v33
    %554 = vmatprep.subr.bf16.mxu0 0
    %555 = vmatpush1.bf16.msra.mxu0 %v32
    %556 = vmatprep.subr.bf16.mxu0 0
    %557 = vmatpush2.bf16.msra.mxu0 0
    %558 = vmatprep.subr.bf16.mxu0 0
    %559 = vmatpush2.bf16.msra.mxu0 0
    %560 = vmatprep.subr.bf16.mxu0 0
    %561 = vmatpush2.bf16.msra.mxu0 0
    %562 = vmatprep.subr.bf16.mxu0 0
    %563 = vmatpush2.bf16.msra.mxu0 0
    %564 = vmatprep.subr.bf16.mxu0 0
    %565 = vmatpush2.bf16.msra.mxu0 0
    %566 = vmatprep.subr.bf16.mxu0 0
    %567 = vmatpush2.bf16.msra.mxu0 0
    %568 = vmatprep.subr.bf16.mxu0 0
    %569 = vmatpush2.bf16.msra.mxu0 0
    %570 = vmatprep.subr.bf16.mxu0 0
    %571 = vmatpush2.bf16.msra.mxu0 0
    %572 = vmatprep.mubr.bf16.mxu0 0
    %573 = vmatmul.mubr.bf16.gmra.mxu0 %v428
    %v574 = vpop.f32.mrf.mxu0
    %v575 = vadd.f32 %v535, %v574
    %v576 = vpop.f32.mrf.mxu0
    %v577 = vpop.f32.mrf.mxu0
    %v578 = vpop.f32.mrf.mxu0
    %579 = vdwg.mxu0
    %v580 = vadd.f32 %v575, %v399
    %v581 = vmul.f32 %v580, %v80
    %v582 = vtanh.pop %v581
    %v583 = vmul.f32 %v582, 0.5
    %v584 = vadd.f32 %v583, 0.5
    %v585 = vsel %vm79, %v582, %v584
    %v586 = vmul.f32 %v585, %v416
    %588 = vrot.lane.b32.xlu0 %v585, 64
    %v589 = vpop.permute.xlu0 %588
    %v591 = vmul.f32 %v585, %v589
    %593 = vrot.lane.b32.xlu0 %v591, 32
    %v594 = vpop.permute.xlu0 %593
    %v596 = vadd.f32 %v586, %v594
    %v597 = vtanh.pop %v596
    %599 = vrot.lane.b32.xlu0 %v597, 64
    %v600 = vpop.permute.xlu0 %599
    %v602 = vmul.f32 %v585, %v600
    %v603 = vpack.c.bf16 %v492, %v492
    %605 = vrot.lane.b32.xlu0 %v603, 32
    %v606 = vpop.permute.xlu0 %605
    %v608 = vsel %vm179, %v606, 0
    %610 = vmatprep.subr.bf16.mxu0 0
    %611 = vmatpush1.bf16.msra.mxu0 0
    %612 = vmatprep.subr.bf16.mxu0 0
    %613 = vmatpush1.bf16.msra.mxu0 0
    %614 = vmatprep.subr.bf16.mxu0 0
    %615 = vmatpush1.bf16.msra.mxu0 0
    %616 = vmatprep.subr.bf16.mxu0 0
    %617 = vmatpush1.bf16.msra.mxu0 0
    %618 = vmatprep.subr.bf16.mxu0 0
    %619 = vmatpush1.bf16.msra.mxu0 0
    %620 = vmatprep.subr.bf16.mxu0 0
    %621 = vmatpush1.bf16.msra.mxu0 0
    %622 = vmatprep.subr.bf16.mxu0 0
    %623 = vmatpush1.bf16.msra.mxu0 %v39
    %624 = vmatprep.subr.bf16.mxu0 0
    %625 = vmatpush1.bf16.msra.mxu0 %v38
    %626 = vmatprep.subr.bf16.mxu0 0
    %627 = vmatpush2.bf16.msra.mxu0 0
    %628 = vmatprep.subr.bf16.mxu0 0
    %629 = vmatpush2.bf16.msra.mxu0 0
    %630 = vmatprep.subr.bf16.mxu0 0
    %631 = vmatpush2.bf16.msra.mxu0 0
    %632 = vmatprep.subr.bf16.mxu0 0
    %633 = vmatpush2.bf16.msra.mxu0 0
    %634 = vmatprep.subr.bf16.mxu0 0
    %635 = vmatpush2.bf16.msra.mxu0 0
    %636 = vmatprep.subr.bf16.mxu0 0
    %637 = vmatpush2.bf16.msra.mxu0 0
    %638 = vmatprep.subr.bf16.mxu0 0
    %639 = vmatpush2.bf16.msra.mxu0 0
    %640 = vmatprep.subr.bf16.mxu0 0
    %641 = vmatpush2.bf16.msra.mxu0 0
    %642 = vmatprep.mubr.bf16.mxu0 0
    %643 = vmatmul.mubr.bf16.gmra.mxu0 %v608
    %v644 = vpop.f32.mrf.mxu0
    %v645 = vadd.f32 0.0, %v644
    %v646 = vpop.f32.mrf.mxu0
    %v647 = vpop.f32.mrf.mxu0
    %v648 = vpop.f32.mrf.mxu0
    %649 = vdwg.mxu0
    %v650 = vadd.f32 %v160, %v645
    %v651 = vmul.f32 %v650, %v80
    %v652 = vtanh.pop %v651
    %v653 = vmul.f32 %v652, 0.5
    %v654 = vadd.f32 %v653, 0.5
    %v655 = vsel %vm79, %v652, %v654
    %v656 = vmul.f32 %v655, %v486
    %658 = vrot.lane.b32.xlu0 %v655, 64
    %v659 = vpop.permute.xlu0 %658
    %v661 = vmul.f32 %v655, %v659
    %663 = vrot.lane.b32.xlu0 %v661, 32
    %v664 = vpop.permute.xlu0 %663
    %v666 = vadd.f32 %v656, %v664
    %v667 = vtanh.pop %v666
    %669 = vrot.lane.b32.xlu0 %v667, 64
    %v670 = vpop.permute.xlu0 %669
    %v672 = vmul.f32 %v655, %v670
    %v673 = vpack.c.bf16 %v602, %v602
    %675 = vrot.lane.b32.xlu0 %v673, 32
    %v676 = vpop.permute.xlu0 %675
    %v678 = vsel %vm179, %v676, 0
    %680 = vmatprep.subr.bf16.mxu0 0
    %681 = vmatpush1.bf16.msra.mxu0 0
    %682 = vmatprep.subr.bf16.mxu0 0
    %683 = vmatpush1.bf16.msra.mxu0 0
    %684 = vmatprep.subr.bf16.mxu0 0
    %685 = vmatpush1.bf16.msra.mxu0 0
    %686 = vmatprep.subr.bf16.mxu0 0
    %687 = vmatpush1.bf16.msra.mxu0 0
    %688 = vmatprep.subr.bf16.mxu0 0
    %689 = vmatpush1.bf16.msra.mxu0 0
    %690 = vmatprep.subr.bf16.mxu0 0
    %691 = vmatpush1.bf16.msra.mxu0 0
    %692 = vmatprep.subr.bf16.mxu0 0
    %693 = vmatpush1.bf16.msra.mxu0 %v45
    %694 = vmatprep.subr.bf16.mxu0 0
    %695 = vmatpush1.bf16.msra.mxu0 %v44
    %696 = vmatprep.subr.bf16.mxu0 0
    %697 = vmatpush2.bf16.msra.mxu0 0
    %698 = vmatprep.subr.bf16.mxu0 0
    %699 = vmatpush2.bf16.msra.mxu0 0
    %700 = vmatprep.subr.bf16.mxu0 0
    %701 = vmatpush2.bf16.msra.mxu0 0
    %702 = vmatprep.subr.bf16.mxu0 0
    %703 = vmatpush2.bf16.msra.mxu0 0
    %704 = vmatprep.subr.bf16.mxu0 0
    %705 = vmatpush2.bf16.msra.mxu0 0
    %706 = vmatprep.subr.bf16.mxu0 0
    %707 = vmatpush2.bf16.msra.mxu0 0
    %708 = vmatprep.subr.bf16.mxu0 0
    %709 = vmatpush2.bf16.msra.mxu0 0
    %710 = vmatprep.subr.bf16.mxu0 0
    %711 = vmatpush2.bf16.msra.mxu0 0
    %712 = vmatprep.mubr.bf16.mxu0 0
    %713 = vmatmul.mubr.bf16.gmra.mxu0 %v678
    %v714 = vpop.f32.mrf.mxu0
    %v715 = vadd.f32 0.0, %v714
    %v716 = vpop.f32.mrf.mxu0
    %v717 = vpop.f32.mrf.mxu0
    %v718 = vpop.f32.mrf.mxu0
    %719 = vdwg.mxu0
    %720 = vmatprep.subr.bf16.mxu0 0
    %721 = vmatpush1.bf16.msra.mxu0 0
    %722 = vmatprep.subr.bf16.mxu0 0
    %723 = vmatpush1.bf16.msra.mxu0 0
    %724 = vmatprep.subr.bf16.mxu0 0
    %725 = vmatpush1.bf16.msra.mxu0 0
    %726 = vmatprep.subr.bf16.mxu0 0
    %727 = vmatpush1.bf16.msra.mxu0 0
    %728 = vmatprep.subr.bf16.mxu0 0
    %729 = vmatpush1.bf16.msra.mxu0 0
    %730 = vmatprep.subr.bf16.mxu0 0
    %731 = vmatpush1.bf16.msra.mxu0 0
    %732 = vmatprep.subr.bf16.mxu0 0
    %733 = vmatpush1.bf16.msra.mxu0 %v33
    %734 = vmatprep.subr.bf16.mxu0 0
    %735 = vmatpush1.bf16.msra.mxu0 %v32
    %736 = vmatprep.subr.bf16.mxu0 0
    %737 = vmatpush2.bf16.msra.mxu0 0
    %738 = vmatprep.subr.bf16.mxu0 0
    %739 = vmatpush2.bf16.msra.mxu0 0
    %740 = vmatprep.subr.bf16.mxu0 0
    %741 = vmatpush2.bf16.msra.mxu0 0
    %742 = vmatprep.subr.bf16.mxu0 0
    %743 = vmatpush2.bf16.msra.mxu0 0
    %744 = vmatprep.subr.bf16.mxu0 0
    %745 = vmatpush2.bf16.msra.mxu0 0
    %746 = vmatprep.subr.bf16.mxu0 0
    %747 = vmatpush2.bf16.msra.mxu0 0
    %748 = vmatprep.subr.bf16.mxu0 0
    %749 = vmatpush2.bf16.msra.mxu0 0
    %750 = vmatprep.subr.bf16.mxu0 0
    %751 = vmatpush2.bf16.msra.mxu0 0
    %752 = vmatprep.mubr.bf16.mxu0 0
    %753 = vmatmul.mubr.bf16.gmra.mxu0 %v608
    %v754 = vpop.f32.mrf.mxu0
    %v755 = vadd.f32 %v715, %v754
    %v756 = vpop.f32.mrf.mxu0
    %v757 = vpop.f32.mrf.mxu0
    %v758 = vpop.f32.mrf.mxu0
    %759 = vdwg.mxu0
    %v760 = vadd.f32 %v755, %v399
    %v761 = vmul.f32 %v760, %v80
    %v762 = vtanh.pop %v761
    %v763 = vmul.f32 %v762, 0.5
    %v764 = vadd.f32 %v763, 0.5
    %v765 = vsel %vm79, %v762, %v764
    %v766 = vmul.f32 %v765, %v596
    %768 = vrot.lane.b32.xlu0 %v765, 64
    %v769 = vpop.permute.xlu0 %768
    %v771 = vmul.f32 %v765, %v769
    %773 = vrot.lane.b32.xlu0 %v771, 32
    %v774 = vpop.permute.xlu0 %773
    %v776 = vadd.f32 %v766, %v774
    %v777 = vtanh.pop %v776
    %779 = vrot.lane.b32.xlu0 %v777, 64
    %v780 = vpop.permute.xlu0 %779
    %v782 = vmul.f32 %v765, %v780
    %v783 = vpack.c.bf16 %v672, %v672
    %785 = vrot.lane.b32.xlu0 %v783, 32
    %v786 = vpop.permute.xlu0 %785
    %v788 = vsel %vm179, %v786, 0
    %790 = vmatprep.subr.bf16.mxu0 0
    %791 = vmatpush1.bf16.msra.mxu0 0
    %792 = vmatprep.subr.bf16.mxu0 0
    %793 = vmatpush1.bf16.msra.mxu0 0
    %794 = vmatprep.subr.bf16.mxu0 0
    %795 = vmatpush1.bf16.msra.mxu0 0
    %796 = vmatprep.subr.bf16.mxu0 0
    %797 = vmatpush1.bf16.msra.mxu0 0
    %798 = vmatprep.subr.bf16.mxu0 0
    %799 = vmatpush1.bf16.msra.mxu0 0
    %800 = vmatprep.subr.bf16.mxu0 0
    %801 = vmatpush1.bf16.msra.mxu0 0
    %802 = vmatprep.subr.bf16.mxu0 0
    %803 = vmatpush1.bf16.msra.mxu0 %v39
    %804 = vmatprep.subr.bf16.mxu0 0
    %805 = vmatpush1.bf16.msra.mxu0 %v38
    %806 = vmatprep.subr.bf16.mxu0 0
    %807 = vmatpush2.bf16.msra.mxu0 0
    %808 = vmatprep.subr.bf16.mxu0 0
    %809 = vmatpush2.bf16.msra.mxu0 0
    %810 = vmatprep.subr.bf16.mxu0 0
    %811 = vmatpush2.bf16.msra.mxu0 0
    %812 = vmatprep.subr.bf16.mxu0 0
    %813 = vmatpush2.bf16.msra.mxu0 0
    %814 = vmatprep.subr.bf16.mxu0 0
    %815 = vmatpush2.bf16.msra.mxu0 0
    %816 = vmatprep.subr.bf16.mxu0 0
    %817 = vmatpush2.bf16.msra.mxu0 0
    %818 = vmatprep.subr.bf16.mxu0 0
    %819 = vmatpush2.bf16.msra.mxu0 0
    %820 = vmatprep.subr.bf16.mxu0 0
    %821 = vmatpush2.bf16.msra.mxu0 0
    %822 = vmatprep.mubr.bf16.mxu0 0
    %823 = vmatmul.mubr.bf16.gmra.mxu0 %v788
    %v824 = vpop.f32.mrf.mxu0
    %v825 = vadd.f32 0.0, %v824
    %v826 = vpop.f32.mrf.mxu0
    %v827 = vpop.f32.mrf.mxu0
    %v828 = vpop.f32.mrf.mxu0
    %829 = vdwg.mxu0
    %v830 = vadd.f32 %v165, %v825
    %v831 = vmul.f32 %v830, %v80
    %v832 = vtanh.pop %v831
    %v833 = vmul.f32 %v832, 0.5
    %v834 = vadd.f32 %v833, 0.5
    %v835 = vsel %vm79, %v832, %v834
    %v836 = vmul.f32 %v835, %v666
    %838 = vrot.lane.b32.xlu0 %v835, 64
    %v839 = vpop.permute.xlu0 %838
    %v841 = vmul.f32 %v835, %v839
    %843 = vrot.lane.b32.xlu0 %v841, 32
    %v844 = vpop.permute.xlu0 %843
    %v846 = vadd.f32 %v836, %v844
    %v847 = vtanh.pop %v846
    %849 = vrot.lane.b32.xlu0 %v847, 64
    %v850 = vpop.permute.xlu0 %849
    %v852 = vmul.f32 %v835, %v850
    %v853 = vpack.c.bf16 %v782, %v782
    %855 = vrot.lane.b32.xlu0 %v853, 32
    %v856 = vpop.permute.xlu0 %855
    %v858 = vsel %vm179, %v856, 0
    %860 = vmatprep.subr.bf16.mxu0 0
    %861 = vmatpush1.bf16.msra.mxu0 0
    %862 = vmatprep.subr.bf16.mxu0 0
    %863 = vmatpush1.bf16.msra.mxu0 0
    %864 = vmatprep.subr.bf16.mxu0 0
    %865 = vmatpush1.bf16.msra.mxu0 0
    %866 = vmatprep.subr.bf16.mxu0 0
    %867 = vmatpush1.bf16.msra.mxu0 0
    %868 = vmatprep.subr.bf16.mxu0 0
    %869 = vmatpush1.bf16.msra.mxu0 0
    %870 = vmatprep.subr.bf16.mxu0 0
    %871 = vmatpush1.bf16.msra.mxu0 0
    %872 = vmatprep.subr.bf16.mxu0 0
    %873 = vmatpush1.bf16.msra.mxu0 %v45
    %874 = vmatprep.subr.bf16.mxu0 0
    %875 = vmatpush1.bf16.msra.mxu0 %v44
    %876 = vmatprep.subr.bf16.mxu0 0
    %877 = vmatpush2.bf16.msra.mxu0 0
    %878 = vmatprep.subr.bf16.mxu0 0
    %879 = vmatpush2.bf16.msra.mxu0 0
    %880 = vmatprep.subr.bf16.mxu0 0
    %881 = vmatpush2.bf16.msra.mxu0 0
    %882 = vmatprep.subr.bf16.mxu0 0
    %883 = vmatpush2.bf16.msra.mxu0 0
    %884 = vmatprep.subr.bf16.mxu0 0
    %885 = vmatpush2.bf16.msra.mxu0 0
    %886 = vmatprep.subr.bf16.mxu0 0
    %887 = vmatpush2.bf16.msra.mxu0 0
    %888 = vmatprep.subr.bf16.mxu0 0
    %889 = vmatpush2.bf16.msra.mxu0 0
    %890 = vmatprep.subr.bf16.mxu0 0
    %891 = vmatpush2.bf16.msra.mxu0 0
    %892 = vmatprep.mubr.bf16.mxu0 0
    %893 = vmatmul.mubr.bf16.gmra.mxu0 %v858
    %v894 = vpop.f32.mrf.mxu0
    %v895 = vadd.f32 0.0, %v894
    %v896 = vpop.f32.mrf.mxu0
    %v897 = vpop.f32.mrf.mxu0
    %v898 = vpop.f32.mrf.mxu0
    %899 = vdwg.mxu0
    %900 = vmatprep.subr.bf16.mxu0 0
    %901 = vmatpush1.bf16.msra.mxu0 0
    %902 = vmatprep.subr.bf16.mxu0 0
    %903 = vmatpush1.bf16.msra.mxu0 0
    %904 = vmatprep.subr.bf16.mxu0 0
    %905 = vmatpush1.bf16.msra.mxu0 0
    %906 = vmatprep.subr.bf16.mxu0 0
    %907 = vmatpush1.bf16.msra.mxu0 0
    %908 = vmatprep.subr.bf16.mxu0 0
    %909 = vmatpush1.bf16.msra.mxu0 0
    %910 = vmatprep.subr.bf16.mxu0 0
    %911 = vmatpush1.bf16.msra.mxu0 0
    %912 = vmatprep.subr.bf16.mxu0 0
    %913 = vmatpush1.bf16.msra.mxu0 %v33
    %914 = vmatprep.subr.bf16.mxu0 0
    %915 = vmatpush1.bf16.msra.mxu0 %v32
    %916 = vmatprep.subr.bf16.mxu0 0
    %917 = vmatpush2.bf16.msra.mxu0 0
    %918 = vmatprep.subr.bf16.mxu0 0
    %919 = vmatpush2.bf16.msra.mxu0 0
    %920 = vmatprep.subr.bf16.mxu0 0
    %921 = vmatpush2.bf16.msra.mxu0 0
    %922 = vmatprep.subr.bf16.mxu0 0
    %923 = vmatpush2.bf16.msra.mxu0 0
    %924 = vmatprep.subr.bf16.mxu0 0
    %925 = vmatpush2.bf16.msra.mxu0 0
    %926 = vmatprep.subr.bf16.mxu0 0
    %927 = vmatpush2.bf16.msra.mxu0 0
    %928 = vmatprep.subr.bf16.mxu0 0
    %929 = vmatpush2.bf16.msra.mxu0 0
    %930 = vmatprep.subr.bf16.mxu0 0
    %931 = vmatpush2.bf16.msra.mxu0 0
    %932 = vmatprep.mubr.bf16.mxu0 0
    %933 = vmatmul.mubr.bf16.gmra.mxu0 %v788
    %v934 = vpop.f32.mrf.mxu0
    %v935 = vadd.f32 %v895, %v934
    %v936 = vpop.f32.mrf.mxu0
    %v937 = vpop.f32.mrf.mxu0
    %v938 = vpop.f32.mrf.mxu0
    %939 = vdwg.mxu0
    %v940 = vadd.f32 %v935, %v399
    %v941 = vmul.f32 %v940, %v80
    %v942 = vtanh.pop %v941
    %v943 = vmul.f32 %v942, 0.5
    %v944 = vadd.f32 %v943, 0.5
    %v945 = vsel %vm79, %v942, %v944
    %v946 = vmul.f32 %v945, %v776
    %948 = vrot.lane.b32.xlu0 %v945, 64
    %v949 = vpop.permute.xlu0 %948
    %v951 = vmul.f32 %v945, %v949
    %953 = vrot.lane.b32.xlu0 %v951, 32
    %v954 = vpop.permute.xlu0 %953
    %v956 = vadd.f32 %v946, %v954
    %v957 = vtanh.pop %v956
    %959 = vrot.lane.b32.xlu0 %v957, 64
    %v960 = vpop.permute.xlu0 %959
    %v962 = vmul.f32 %v945, %v960
    %v963 = vpack.c.bf16 %v852, %v852
    %965 = vrot.lane.b32.xlu0 %v963, 32
    %v966 = vpop.permute.xlu0 %965
    %v968 = vsel %vm179, %v966, 0
    %970 = vmatprep.subr.bf16.mxu0 0
    %971 = vmatpush1.bf16.msra.mxu0 0
    %972 = vmatprep.subr.bf16.mxu0 0
    %973 = vmatpush1.bf16.msra.mxu0 0
    %974 = vmatprep.subr.bf16.mxu0 0
    %975 = vmatpush1.bf16.msra.mxu0 0
    %976 = vmatprep.subr.bf16.mxu0 0
    %977 = vmatpush1.bf16.msra.mxu0 0
    %978 = vmatprep.subr.bf16.mxu0 0
    %979 = vmatpush1.bf16.msra.mxu0 0
    %980 = vmatprep.subr.bf16.mxu0 0
    %981 = vmatpush1.bf16.msra.mxu0 0
    %982 = vmatprep.subr.bf16.mxu0 0
    %983 = vmatpush1.bf16.msra.mxu0 %v39
    %984 = vmatprep.subr.bf16.mxu0 0
    %985 = vmatpush1.bf16.msra.mxu0 %v38
    %986 = vmatprep.subr.bf16.mxu0 0
    %987 = vmatpush2.bf16.msra.mxu0 0
    %988 = vmatprep.subr.bf16.mxu0 0
    %989 = vmatpush2.bf16.msra.mxu0 0
    %990 = vmatprep.subr.bf16.mxu0 0
    %991 = vmatpush2.bf16.msra.mxu0 0
    %992 = vmatprep.subr.bf16.mxu0 0
    %993 = vmatpush2.bf16.msra.mxu0 0
    %994 = vmatprep.subr.bf16.mxu0 0
    %995 = vmatpush2.bf16.msra.mxu0 0
    %996 = vmatprep.subr.bf16.mxu0 0
    %997 = vmatpush2.bf16.msra.mxu0 0
    %998 = vmatprep.subr.bf16.mxu0 0
    %999 = vmatpush2.bf16.msra.mxu0 0
    %1000 = vmatprep.subr.bf16.mxu0 0
    %1001 = vmatpush2.bf16.msra.mxu0 0
    %1002 = vmatprep.mubr.bf16.mxu0 0
    %1003 = vmatmul.mubr.bf16.gmra.mxu0 %v968
    %v1004 = vpop.f32.mrf.mxu0
    %v1005 = vadd.f32 0.0, %v1004
    %v1006 = vpop.f32.mrf.mxu0
    %v1007 = vpop.f32.mrf.mxu0
    %v1008 = vpop.f32.mrf.mxu0
    %1009 = vdwg.mxu0
    %v1010 = vadd.f32 %v168, %v1005
    %v1011 = vmul.f32 %v1010, %v80
    %v1012 = vtanh.pop %v1011
    %v1013 = vmul.f32 %v1012, 0.5
    %v1014 = vadd.f32 %v1013, 0.5
    %v1015 = vsel %vm79, %v1012, %v1014
    %v1016 = vmul.f32 %v1015, %v846
    %1018 = vrot.lane.b32.xlu0 %v1015, 64
    %v1019 = vpop.permute.xlu0 %1018
    %v1021 = vmul.f32 %v1015, %v1019
    %1023 = vrot.lane.b32.xlu0 %v1021, 32
    %v1024 = vpop.permute.xlu0 %1023
    %v1026 = vadd.f32 %v1016, %v1024
    %v1027 = vtanh.pop %v1026
    %1029 = vrot.lane.b32.xlu0 %v1027, 64
    %v1030 = vpop.permute.xlu0 %1029
    %v1032 = vmul.f32 %v1015, %v1030
    %v1033 = vpack.c.bf16 %v962, %v962
    %1035 = vrot.lane.b32.xlu0 %v1033, 32
    %v1036 = vpop.permute.xlu0 %1035
    %v1038 = vsel %vm179, %v1036, 0
    %1040 = vmatprep.subr.bf16.mxu0 0
    %1041 = vmatpush1.bf16.msra.mxu0 0
    %1042 = vmatprep.subr.bf16.mxu0 0
    %1043 = vmatpush1.bf16.msra.mxu0 0
    %1044 = vmatprep.subr.bf16.mxu0 0
    %1045 = vmatpush1.bf16.msra.mxu0 0
    %1046 = vmatprep.subr.bf16.mxu0 0
    %1047 = vmatpush1.bf16.msra.mxu0 0
    %1048 = vmatprep.subr.bf16.mxu0 0
    %1049 = vmatpush1.bf16.msra.mxu0 0
    %1050 = vmatprep.subr.bf16.mxu0 0
    %1051 = vmatpush1.bf16.msra.mxu0 0
    %1052 = vmatprep.subr.bf16.mxu0 0
    %1053 = vmatpush1.bf16.msra.mxu0 %v45
    %1054 = vmatprep.subr.bf16.mxu0 0
    %1055 = vmatpush1.bf16.msra.mxu0 %v44
    %1056 = vmatprep.subr.bf16.mxu0 0
    %1057 = vmatpush2.bf16.msra.mxu0 0
    %1058 = vmatprep.subr.bf16.mxu0 0
    %1059 = vmatpush2.bf16.msra.mxu0 0
    %1060 = vmatprep.subr.bf16.mxu0 0
    %1061 = vmatpush2.bf16.msra.mxu0 0
    %1062 = vmatprep.subr.bf16.mxu0 0
    %1063 = vmatpush2.bf16.msra.mxu0 0
    %1064 = vmatprep.subr.bf16.mxu0 0
    %1065 = vmatpush2.bf16.msra.mxu0 0
    %1066 = vmatprep.subr.bf16.mxu0 0
    %1067 = vmatpush2.bf16.msra.mxu0 0
    %1068 = vmatprep.subr.bf16.mxu0 0
    %1069 = vmatpush2.bf16.msra.mxu0 0
    %1070 = vmatprep.subr.bf16.mxu0 0
    %1071 = vmatpush2.bf16.msra.mxu0 0
    %1072 = vmatprep.mubr.bf16.mxu0 0
    %1073 = vmatmul.mubr.bf16.gmra.mxu0 %v1038
    %v1074 = vpop.f32.mrf.mxu0
    %v1075 = vadd.f32 0.0, %v1074
    %v1076 = vpop.f32.mrf.mxu0
    %v1077 = vpop.f32.mrf.mxu0
    %v1078 = vpop.f32.mrf.mxu0
    %1079 = vdwg.mxu0
    %1080 = vmatprep.subr.bf16.mxu0 0
    %1081 = vmatpush1.bf16.msra.mxu0 0
    %1082 = vmatprep.subr.bf16.mxu0 0
    %1083 = vmatpush1.bf16.msra.mxu0 0
    %1084 = vmatprep.subr.bf16.mxu0 0
    %1085 = vmatpush1.bf16.msra.mxu0 0
    %1086 = vmatprep.subr.bf16.mxu0 0
    %1087 = vmatpush1.bf16.msra.mxu0 0
    %1088 = vmatprep.subr.bf16.mxu0 0
    %1089 = vmatpush1.bf16.msra.mxu0 0
    %1090 = vmatprep.subr.bf16.mxu0 0
    %1091 = vmatpush1.bf16.msra.mxu0 0
    %1092 = vmatprep.subr.bf16.mxu0 0
    %1093 = vmatpush1.bf16.msra.mxu0 %v33
    %1094 = vmatprep.subr.bf16.mxu0 0
    %1095 = vmatpush1.bf16.msra.mxu0 %v32
    %1096 = vmatprep.subr.bf16.mxu0 0
    %1097 = vmatpush2.bf16.msra.mxu0 0
    %1098 = vmatprep.subr.bf16.mxu0 0
    %1099 = vmatpush2.bf16.msra.mxu0 0
    %1100 = vmatprep.subr.bf16.mxu0 0
    %1101 = vmatpush2.bf16.msra.mxu0 0
    %1102 = vmatprep.subr.bf16.mxu0 0
    %1103 = vmatpush2.bf16.msra.mxu0 0
    %1104 = vmatprep.subr.bf16.mxu0 0
    %1105 = vmatpush2.bf16.msra.mxu0 0
    %1106 = vmatprep.subr.bf16.mxu0 0
    %1107 = vmatpush2.bf16.msra.mxu0 0
    %1108 = vmatprep.subr.bf16.mxu0 0
    %1109 = vmatpush2.bf16.msra.mxu0 0
    %1110 = vmatprep.subr.bf16.mxu0 0
    %1111 = vmatpush2.bf16.msra.mxu0 0
    %1112 = vmatprep.mubr.bf16.mxu0 0
    %1113 = vmatmul.mubr.bf16.gmra.mxu0 %v968
    %v1114 = vpop.f32.mrf.mxu0
    %v1115 = vadd.f32 %v1075, %v1114
    %v1116 = vpop.f32.mrf.mxu0
    %v1117 = vpop.f32.mrf.mxu0
    %v1118 = vpop.f32.mrf.mxu0
    %1119 = vdwg.mxu0
    %v1120 = vadd.f32 %v1115, %v399
    %v1121 = vmul.f32 %v1120, %v80
    %v1122 = vtanh.pop %v1121
    %v1123 = vmul.f32 %v1122, 0.5
    %v1124 = vadd.f32 %v1123, 0.5
    %v1125 = vsel %vm79, %v1122, %v1124
    %v1126 = vmul.f32 %v1125, %v956
    %1128 = vrot.lane.b32.xlu0 %v1125, 64
    %v1129 = vpop.permute.xlu0 %1128
    %v1131 = vmul.f32 %v1125, %v1129
    %1133 = vrot.lane.b32.xlu0 %v1131, 32
    %v1134 = vpop.permute.xlu0 %1133
    %v1136 = vadd.f32 %v1126, %v1134
    %v1137 = vtanh.pop %v1136
    %1139 = vrot.lane.b32.xlu0 %v1137, 64
    %v1140 = vpop.permute.xlu0 %1139
    %v1142 = vmul.f32 %v1125, %v1140
    %v1143 = vpack.c.bf16 %v1032, %v1032
    %1145 = vrot.lane.b32.xlu0 %v1143, 32
    %v1146 = vpop.permute.xlu0 %1145
    %v1148 = vsel %vm179, %v1146, 0
    %1150 = vmatprep.subr.bf16.mxu0 0
    %1151 = vmatpush1.bf16.msra.mxu0 0
    %1152 = vmatprep.subr.bf16.mxu0 0
    %1153 = vmatpush1.bf16.msra.mxu0 0
    %1154 = vmatprep.subr.bf16.mxu0 0
    %1155 = vmatpush1.bf16.msra.mxu0 0
    %1156 = vmatprep.subr.bf16.mxu0 0
    %1157 = vmatpush1.bf16.msra.mxu0 0
    %1158 = vmatprep.subr.bf16.mxu0 0
    %1159 = vmatpush1.bf16.msra.mxu0 0
    %1160 = vmatprep.subr.bf16.mxu0 0
    %1161 = vmatpush1.bf16.msra.mxu0 0
    %1162 = vmatprep.subr.bf16.mxu0 0
    %1163 = vmatpush1.bf16.msra.mxu0 %v39
    %1164 = vmatprep.subr.bf16.mxu0 0
    %1165 = vmatpush1.bf16.msra.mxu0 %v38
    %1166 = vmatprep.subr.bf16.mxu0 0
    %1167 = vmatpush2.bf16.msra.mxu0 0
    %1168 = vmatprep.subr.bf16.mxu0 0
    %1169 = vmatpush2.bf16.msra.mxu0 0
    %1170 = vmatprep.subr.bf16.mxu0 0
    %1171 = vmatpush2.bf16.msra.mxu0 0
    %1172 = vmatprep.subr.bf16.mxu0 0
    %1173 = vmatpush2.bf16.msra.mxu0 0
    %1174 = vmatprep.subr.bf16.mxu0 0
    %1175 = vmatpush2.bf16.msra.mxu0 0
    %1176 = vmatprep.subr.bf16.mxu0 0
    %1177 = vmatpush2.bf16.msra.mxu0 0
    %1178 = vmatprep.subr.bf16.mxu0 0
    %1179 = vmatpush2.bf16.msra.mxu0 0
    %1180 = vmatprep.subr.bf16.mxu0 0
    %1181 = vmatpush2.bf16.msra.mxu0 0
    %1182 = vmatprep.mubr.bf16.mxu0 0
    %1183 = vmatmul.mubr.bf16.gmra.mxu0 %v1148
    %v1184 = vpop.f32.mrf.mxu0
    %v1185 = vadd.f32 0.0, %v1184
    %v1186 = vpop.f32.mrf.mxu0
    %v1187 = vpop.f32.mrf.mxu0
    %v1188 = vpop.f32.mrf.mxu0
    %1189 = vdwg.mxu0
    %v1190 = vadd.f32 %v173, %v1185
    %v1191 = vmul.f32 %v1190, %v80
    %v1192 = vtanh.pop %v1191
    %v1193 = vmul.f32 %v1192, 0.5
    %v1194 = vadd.f32 %v1193, 0.5
    %v1195 = vsel %vm79, %v1192, %v1194
    %v1196 = vmul.f32 %v1195, %v1026
    %1198 = vrot.lane.b32.xlu0 %v1195, 64
    %v1199 = vpop.permute.xlu0 %1198
    %v1201 = vmul.f32 %v1195, %v1199
    %1203 = vrot.lane.b32.xlu0 %v1201, 32
    %v1204 = vpop.permute.xlu0 %1203
    %v1206 = vadd.f32 %v1196, %v1204
    %v1207 = vtanh.pop %v1206
    %1209 = vrot.lane.b32.xlu0 %v1207, 64
    %v1210 = vpop.permute.xlu0 %1209
    %v1212 = vmul.f32 %v1195, %v1210
    %v1213 = vpack.c.bf16 %v1142, %v1142
    %1215 = vrot.lane.b32.xlu0 %v1213, 32
    %v1216 = vpop.permute.xlu0 %1215
    %v1218 = vsel %vm179, %v1216, 0
    %1220 = vmatprep.subr.bf16.mxu0 0
    %1221 = vmatpush1.bf16.msra.mxu0 0
    %1222 = vmatprep.subr.bf16.mxu0 0
    %1223 = vmatpush1.bf16.msra.mxu0 0
    %1224 = vmatprep.subr.bf16.mxu0 0
    %1225 = vmatpush1.bf16.msra.mxu0 0
    %1226 = vmatprep.subr.bf16.mxu0 0
    %1227 = vmatpush1.bf16.msra.mxu0 0
    %1228 = vmatprep.subr.bf16.mxu0 0
    %1229 = vmatpush1.bf16.msra.mxu0 0
    %1230 = vmatprep.subr.bf16.mxu0 0
    %1231 = vmatpush1.bf16.msra.mxu0 0
    %1232 = vmatprep.subr.bf16.mxu0 0
    %1233 = vmatpush1.bf16.msra.mxu0 %v45
    %1234 = vmatprep.subr.bf16.mxu0 0
    %1235 = vmatpush1.bf16.msra.mxu0 %v44
    %1236 = vmatprep.subr.bf16.mxu0 0
    %1237 = vmatpush2.bf16.msra.mxu0 0
    %1238 = vmatprep.subr.bf16.mxu0 0
    %1239 = vmatpush2.bf16.msra.mxu0 0
    %1240 = vmatprep.subr.bf16.mxu0 0
    %1241 = vmatpush2.bf16.msra.mxu0 0
    %1242 = vmatprep.subr.bf16.mxu0 0
    %1243 = vmatpush2.bf16.msra.mxu0 0
    %1244 = vmatprep.subr.bf16.mxu0 0
    %1245 = vmatpush2.bf16.msra.mxu0 0
    %1246 = vmatprep.subr.bf16.mxu0 0
    %1247 = vmatpush2.bf16.msra.mxu0 0
    %1248 = vmatprep.subr.bf16.mxu0 0
    %1249 = vmatpush2.bf16.msra.mxu0 0
    %1250 = vmatprep.subr.bf16.mxu0 0
    %1251 = vmatpush2.bf16.msra.mxu0 0
    %1252 = vmatprep.mubr.bf16.mxu0 0
    %1253 = vmatmul.mubr.bf16.gmra.mxu0 %v1218
    %v1254 = vpop.f32.mrf.mxu0
    %v1255 = vadd.f32 0.0, %v1254
    %v1256 = vpop.f32.mrf.mxu0
    %v1257 = vpop.f32.mrf.mxu0
    %v1258 = vpop.f32.mrf.mxu0
    %1259 = vdwg.mxu0
    %1260 = vmatprep.subr.bf16.mxu0 0
    %1261 = vmatpush1.bf16.msra.mxu0 0
    %1262 = vmatprep.subr.bf16.mxu0 0
    %1263 = vmatpush1.bf16.msra.mxu0 0
    %1264 = vmatprep.subr.bf16.mxu0 0
    %1265 = vmatpush1.bf16.msra.mxu0 0
    %1266 = vmatprep.subr.bf16.mxu0 0
    %1267 = vmatpush1.bf16.msra.mxu0 0
    %1268 = vmatprep.subr.bf16.mxu0 0
    %1269 = vmatpush1.bf16.msra.mxu0 0
    %1270 = vmatprep.subr.bf16.mxu0 0
    %1271 = vmatpush1.bf16.msra.mxu0 0
    %1272 = vmatprep.subr.bf16.mxu0 0
    %1273 = vmatpush1.bf16.msra.mxu0 %v33
    %1274 = vmatprep.subr.bf16.mxu0 0
    %1275 = vmatpush1.bf16.msra.mxu0 %v32
    %1276 = vmatprep.subr.bf16.mxu0 0
    %1277 = vmatpush2.bf16.msra.mxu0 0
    %1278 = vmatprep.subr.bf16.mxu0 0
    %1279 = vmatpush2.bf16.msra.mxu0 0
    %1280 = vmatprep.subr.bf16.mxu0 0
    %1281 = vmatpush2.bf16.msra.mxu0 0
    %1282 = vmatprep.subr.bf16.mxu0 0
    %1283 = vmatpush2.bf16.msra.mxu0 0
    %1284 = vmatprep.subr.bf16.mxu0 0
    %1285 = vmatpush2.bf16.msra.mxu0 0
    %1286 = vmatprep.subr.bf16.mxu0 0
    %1287 = vmatpush2.bf16.msra.mxu0 0
    %1288 = vmatprep.subr.bf16.mxu0 0
    %1289 = vmatpush2.bf16.msra.mxu0 0
    %1290 = vmatprep.subr.bf16.mxu0 0
    %1291 = vmatpush2.bf16.msra.mxu0 0
    %1292 = vmatprep.mubr.bf16.mxu0 0
    %1293 = vmatmul.mubr.bf16.gmra.mxu0 %v1148
    %v1294 = vpop.f32.mrf.mxu0
    %v1295 = vadd.f32 %v1255, %v1294
    %v1296 = vpop.f32.mrf.mxu0
    %v1297 = vpop.f32.mrf.mxu0
    %v1298 = vpop.f32.mrf.mxu0
    %1299 = vdwg.mxu0
    %v1300 = vadd.f32 %v1295, %v399
    %v1301 = vmul.f32 %v1300, %v80
    %v1302 = vtanh.pop %v1301
    %v1303 = vmul.f32 %v1302, 0.5
    %v1304 = vadd.f32 %v1303, 0.5
    %v1305 = vsel %vm79, %v1302, %v1304
    %v1306 = vmul.f32 %v1305, %v1136
    %1308 = vrot.lane.b32.xlu0 %v1305, 64
    %v1309 = vpop.permute.xlu0 %1308
    %v1311 = vmul.f32 %v1305, %v1309
    %1313 = vrot.lane.b32.xlu0 %v1311, 32
    %v1314 = vpop.permute.xlu0 %1313
    %v1316 = vadd.f32 %v1306, %v1314
    %v1317 = vtanh.pop %v1316
    %1319 = vrot.lane.b32.xlu0 %v1317, 64
    %v1320 = vpop.permute.xlu0 %1319
    %v1322 = vmul.f32 %v1305, %v1320
    %v1323 = vpack.c.bf16 %v1212, %v1212
    %1325 = vrot.lane.b32.xlu0 %v1323, 32
    %v1326 = vpop.permute.xlu0 %1325
    %v1328 = vsel %vm179, %v1326, 0
    %1330 = vmatprep.subr.bf16.mxu0 0
    %1331 = vmatpush1.bf16.msra.mxu0 0
    %1332 = vmatprep.subr.bf16.mxu0 0
    %1333 = vmatpush1.bf16.msra.mxu0 0
    %1334 = vmatprep.subr.bf16.mxu0 0
    %1335 = vmatpush1.bf16.msra.mxu0 0
    %1336 = vmatprep.subr.bf16.mxu0 0
    %1337 = vmatpush1.bf16.msra.mxu0 0
    %1338 = vmatprep.subr.bf16.mxu0 0
    %1339 = vmatpush1.bf16.msra.mxu0 0
    %1340 = vmatprep.subr.bf16.mxu0 0
    %1341 = vmatpush1.bf16.msra.mxu0 0
    %1342 = vmatprep.subr.bf16.mxu0 0
    %1343 = vmatpush1.bf16.msra.mxu0 %v39
    %1344 = vmatprep.subr.bf16.mxu0 0
    %1345 = vmatpush1.bf16.msra.mxu0 %v38
    %1346 = vmatprep.subr.bf16.mxu0 0
    %1347 = vmatpush2.bf16.msra.mxu0 0
    %1348 = vmatprep.subr.bf16.mxu0 0
    %1349 = vmatpush2.bf16.msra.mxu0 0
    %1350 = vmatprep.subr.bf16.mxu0 0
    %1351 = vmatpush2.bf16.msra.mxu0 0
    %1352 = vmatprep.subr.bf16.mxu0 0
    %1353 = vmatpush2.bf16.msra.mxu0 0
    %1354 = vmatprep.subr.bf16.mxu0 0
    %1355 = vmatpush2.bf16.msra.mxu0 0
    %1356 = vmatprep.subr.bf16.mxu0 0
    %1357 = vmatpush2.bf16.msra.mxu0 0
    %1358 = vmatprep.subr.bf16.mxu0 0
    %1359 = vmatpush2.bf16.msra.mxu0 0
    %1360 = vmatprep.subr.bf16.mxu0 0
    %1361 = vmatpush2.bf16.msra.mxu0 0
    %1362 = vmatprep.mubr.bf16.mxu0 0
    %1363 = vmatmul.mubr.bf16.gmra.mxu0 %v1328
    %v1364 = vpop.f32.mrf.mxu0
    %v1365 = vadd.f32 0.0, %v1364
    %v1366 = vpop.f32.mrf.mxu0
    %v1367 = vpop.f32.mrf.mxu0
    %v1368 = vpop.f32.mrf.mxu0
    %1369 = vdwg.mxu0
    %v1370 = vadd.f32 %v176, %v1365
    %v1371 = vmul.f32 %v1370, %v80
    %v1372 = vtanh.pop %v1371
    %v1373 = vmul.f32 %v1372, 0.5
    %v1374 = vadd.f32 %v1373, 0.5
    %v1375 = vsel %vm79, %v1372, %v1374
    %v1376 = vmul.f32 %v1375, %v1206
    %1378 = vrot.lane.b32.xlu0 %v1375, 64
    %v1379 = vpop.permute.xlu0 %1378
    %v1381 = vmul.f32 %v1375, %v1379
    %1383 = vrot.lane.b32.xlu0 %v1381, 32
    %v1384 = vpop.permute.xlu0 %1383
    %v1386 = vadd.f32 %v1376, %v1384
    %v1387 = vtanh.pop %v1386
    %1389 = vrot.lane.b32.xlu0 %v1387, 64
    %v1390 = vpop.permute.xlu0 %1389
    %v1392 = vmul.f32 %v1375, %v1390
    %v1393 = vpack.c.bf16 %v1322, %v1322
    %1395 = vrot.lane.b32.xlu0 %v1393, 32
    %v1396 = vpop.permute.xlu0 %1395
    %v1398 = vsel %vm179, %v1396, 0
    %1400 = vmatprep.subr.bf16.mxu0 0
    %1401 = vmatpush1.bf16.msra.mxu0 0
    %1402 = vmatprep.subr.bf16.mxu0 0
    %1403 = vmatpush1.bf16.msra.mxu0 0
    %1404 = vmatprep.subr.bf16.mxu0 0
    %1405 = vmatpush1.bf16.msra.mxu0 0
    %1406 = vmatprep.subr.bf16.mxu0 0
    %1407 = vmatpush1.bf16.msra.mxu0 0
    %1408 = vmatprep.subr.bf16.mxu0 0
    %1409 = vmatpush1.bf16.msra.mxu0 0
    %1410 = vmatprep.subr.bf16.mxu0 0
    %1411 = vmatpush1.bf16.msra.mxu0 0
    %1412 = vmatprep.subr.bf16.mxu0 0
    %1413 = vmatpush1.bf16.msra.mxu0 %v45
    %1414 = vmatprep.subr.bf16.mxu0 0
    %1415 = vmatpush1.bf16.msra.mxu0 %v44
    %1416 = vmatprep.subr.bf16.mxu0 0
    %1417 = vmatpush2.bf16.msra.mxu0 0
    %1418 = vmatprep.subr.bf16.mxu0 0
    %1419 = vmatpush2.bf16.msra.mxu0 0
    %1420 = vmatprep.subr.bf16.mxu0 0
    %1421 = vmatpush2.bf16.msra.mxu0 0
    %1422 = vmatprep.subr.bf16.mxu0 0
    %1423 = vmatpush2.bf16.msra.mxu0 0
    %1424 = vmatprep.subr.bf16.mxu0 0
    %1425 = vmatpush2.bf16.msra.mxu0 0
    %1426 = vmatprep.subr.bf16.mxu0 0
    %1427 = vmatpush2.bf16.msra.mxu0 0
    %1428 = vmatprep.subr.bf16.mxu0 0
    %1429 = vmatpush2.bf16.msra.mxu0 0
    %1430 = vmatprep.subr.bf16.mxu0 0
    %1431 = vmatpush2.bf16.msra.mxu0 0
    %1432 = vmatprep.mubr.bf16.mxu0 0
    %1433 = vmatmul.mubr.bf16.gmra.mxu0 %v1398
    %v1434 = vpop.f32.mrf.mxu0
    %v1435 = vadd.f32 0.0, %v1434
    %v1436 = vpop.f32.mrf.mxu0
    %v1437 = vpop.f32.mrf.mxu0
    %v1438 = vpop.f32.mrf.mxu0
    %1439 = vdwg.mxu0
    %1440 = vmatprep.subr.bf16.mxu0 0
    %1441 = vmatpush1.bf16.msra.mxu0 0
    %1442 = vmatprep.subr.bf16.mxu0 0
    %1443 = vmatpush1.bf16.msra.mxu0 0
    %1444 = vmatprep.subr.bf16.mxu0 0
    %1445 = vmatpush1.bf16.msra.mxu0 0
    %1446 = vmatprep.subr.bf16.mxu0 0
    %1447 = vmatpush1.bf16.msra.mxu0 0
    %1448 = vmatprep.subr.bf16.mxu0 0
    %1449 = vmatpush1.bf16.msra.mxu0 0
    %1450 = vmatprep.subr.bf16.mxu0 0
    %1451 = vmatpush1.bf16.msra.mxu0 0
    %1452 = vmatprep.subr.bf16.mxu0 0
    %1453 = vmatpush1.bf16.msra.mxu0 %v33
    %1454 = vmatprep.subr.bf16.mxu0 0
    %1455 = vmatpush1.bf16.msra.mxu0 %v32
    %1456 = vmatprep.subr.bf16.mxu0 0
    %1457 = vmatpush2.bf16.msra.mxu0 0
    %1458 = vmatprep.subr.bf16.mxu0 0
    %1459 = vmatpush2.bf16.msra.mxu0 0
    %1460 = vmatprep.subr.bf16.mxu0 0
    %1461 = vmatpush2.bf16.msra.mxu0 0
    %1462 = vmatprep.subr.bf16.mxu0 0
    %1463 = vmatpush2.bf16.msra.mxu0 0
    %1464 = vmatprep.subr.bf16.mxu0 0
    %1465 = vmatpush2.bf16.msra.mxu0 0
    %1466 = vmatprep.subr.bf16.mxu0 0
    %1467 = vmatpush2.bf16.msra.mxu0 0
    %1468 = vmatprep.subr.bf16.mxu0 0
    %1469 = vmatpush2.bf16.msra.mxu0 0
    %1470 = vmatprep.subr.bf16.mxu0 0
    %1471 = vmatpush2.bf16.msra.mxu0 0
    %1472 = vmatprep.mubr.bf16.mxu0 0
    %1473 = vmatmul.mubr.bf16.gmra.mxu0 %v1328
    %v1474 = vpop.f32.mrf.mxu0
    %v1475 = vadd.f32 %v1435, %v1474
    %v1476 = vpop.f32.mrf.mxu0
    %v1477 = vpop.f32.mrf.mxu0
    %v1478 = vpop.f32.mrf.mxu0
    %1479 = vdwg.mxu0
    %v1480 = vadd.f32 %v1475, %v399
    %v1481 = vmul.f32 %v1480, %v80
    %v1482 = vtanh.pop %v1481
    %v1483 = vmul.f32 %v1482, 0.5
    %v1484 = vadd.f32 %v1483, 0.5
    %v1485 = vsel %vm79, %v1482, %v1484
    %v1486 = vmul.f32 %v1485, %v1316
    %1488 = vrot.lane.b32.xlu0 %v1485, 64
    %v1489 = vpop.permute.xlu0 %1488
    %v1491 = vmul.f32 %v1485, %v1489
    %1493 = vrot.lane.b32.xlu0 %v1491, 32
    %v1494 = vpop.permute.xlu0 %1493
    %v1496 = vadd.f32 %v1486, %v1494
    %v1497 = vtanh.pop %v1496
    %1499 = vrot.lane.b32.xlu0 %v1497, 64
    %v1500 = vpop.permute.xlu0 %1499
    %v1502 = vmul.f32 %v1485, %v1500
    %v1503 = vpack.c.bf16 %v1392, %v1392
    %v1504 = vpack.c.bf16 %v1502, %v1502
    %1506 = vrot.lane.b32.xlu0 %v1504, 32
    %v1507 = vpop.permute.xlu0 %1506
    %v1509 = vsel %vm179, %v1507, 0
    %1511 = vmatprep.subr.bf16.mxu0 0
    %1512 = vmatpush1.bf16.msra.mxu0 0
    %1513 = vmatprep.subr.bf16.mxu0 0
    %1514 = vmatpush1.bf16.msra.mxu0 0
    %1515 = vmatprep.subr.bf16.mxu0 0
    %1516 = vmatpush1.bf16.msra.mxu0 0
    %1517 = vmatprep.subr.bf16.mxu0 0
    %1518 = vmatpush1.bf16.msra.mxu0 0
    %1519 = vmatprep.subr.bf16.mxu0 0
    %1520 = vmatpush1.bf16.msra.mxu0 0
    %1521 = vmatprep.subr.bf16.mxu0 0
    %1522 = vmatpush1.bf16.msra.mxu0 0
    %1523 = vmatprep.subr.bf16.mxu0 0
    %1524 = vmatpush1.bf16.msra.mxu0 %v45
    %1525 = vmatprep.subr.bf16.mxu0 0
    %1526 = vmatpush1.bf16.msra.mxu0 %v44
    %1527 = vmatprep.subr.bf16.mxu0 0
    %1528 = vmatpush2.bf16.msra.mxu0 0
    %1529 = vmatprep.subr.bf16.mxu0 0
    %1530 = vmatpush2.bf16.msra.mxu0 0
    %1531 = vmatprep.subr.bf16.mxu0 0
    %1532 = vmatpush2.bf16.msra.mxu0 0
    %1533 = vmatprep.subr.bf16.mxu0 0
    %1534 = vmatpush2.bf16.msra.mxu0 0
    %1535 = vmatprep.subr.bf16.mxu0 0
    %1536 = vmatpush2.bf16.msra.mxu0 0
    %1537 = vmatprep.subr.bf16.mxu0 0
    %1538 = vmatpush2.bf16.msra.mxu0 0
    %1539 = vmatprep.subr.bf16.mxu0 0
    %1540 = vmatpush2.bf16.msra.mxu0 0
    %1541 = vmatprep.subr.bf16.mxu0 0
    %1542 = vmatpush2.bf16.msra.mxu0 0
    %1543 = vmatprep.mubr.bf16.mxu0 0
    %1544 = vmatmul.mubr.bf16.gmra.mxu0 %v1509
    %v1545 = vpop.f32.mrf.mxu0
    %v1546 = vadd.f32 0.0, %v1545
    %v1547 = vpop.f32.mrf.mxu0
    %v1548 = vpop.f32.mrf.mxu0
    %v1549 = vpop.f32.mrf.mxu0
    %1550 = vdwg.mxu0
    %1552 = vrot.lane.b32.xlu0 %v1503, 32
    %v1553 = vpop.permute.xlu0 %1552
    %v1555 = vsel %vm179, %v1553, 0
    %1557 = vmatprep.subr.bf16.mxu0 0
    %1558 = vmatpush1.bf16.msra.mxu0 0
    %1559 = vmatprep.subr.bf16.mxu0 0
    %1560 = vmatpush1.bf16.msra.mxu0 0
    %1561 = vmatprep.subr.bf16.mxu0 0
    %1562 = vmatpush1.bf16.msra.mxu0 0
    %1563 = vmatprep.subr.bf16.mxu0 0
    %1564 = vmatpush1.bf16.msra.mxu0 0
    %1565 = vmatprep.subr.bf16.mxu0 0
    %1566 = vmatpush1.bf16.msra.mxu0 0
    %1567 = vmatprep.subr.bf16.mxu0 0
    %1568 = vmatpush1.bf16.msra.mxu0 0
    %1569 = vmatprep.subr.bf16.mxu0 0
    %1570 = vmatpush1.bf16.msra.mxu0 %v33
    %1571 = vmatprep.subr.bf16.mxu0 0
    %1572 = vmatpush1.bf16.msra.mxu0 %v32
    %1573 = vmatprep.subr.bf16.mxu0 0
    %1574 = vmatpush2.bf16.msra.mxu0 0
    %1575 = vmatprep.subr.bf16.mxu0 0
    %1576 = vmatpush2.bf16.msra.mxu0 0
    %1577 = vmatprep.subr.bf16.mxu0 0
    %1578 = vmatpush2.bf16.msra.mxu0 0
    %1579 = vmatprep.subr.bf16.mxu0 0
    %1580 = vmatpush2.bf16.msra.mxu0 0
    %1581 = vmatprep.subr.bf16.mxu0 0
    %1582 = vmatpush2.bf16.msra.mxu0 0
    %1583 = vmatprep.subr.bf16.mxu0 0
    %1584 = vmatpush2.bf16.msra.mxu0 0
    %1585 = vmatprep.subr.bf16.mxu0 0
    %1586 = vmatpush2.bf16.msra.mxu0 0
    %1587 = vmatprep.subr.bf16.mxu0 0
    %1588 = vmatpush2.bf16.msra.mxu0 0
    %1589 = vmatprep.mubr.bf16.mxu0 0
    %1590 = vmatmul.mubr.bf16.gmra.mxu0 %v1555
    %v1591 = vpop.f32.mrf.mxu0
    %v1592 = vadd.f32 %v1546, %v1591
    %v1593 = vpop.f32.mrf.mxu0
    %v1594 = vpop.f32.mrf.mxu0
    %v1595 = vpop.f32.mrf.mxu0
    %1596 = vdwg.mxu0
    %v1597 = vadd.f32 %v1592, %v399
    %v1598 = vmul.f32 %v1597, %v80
    %v1599 = vtanh.pop %v1598
    %v1600 = vmul.f32 %v1599, 0.5
    %v1601 = vadd.f32 %v1600, 0.5
    %v1602 = vsel %vm79, %v1599, %v1601
    %v1603 = vmul.f32 %v1602, %v1496
    %1605 = vrot.lane.b32.xlu0 %v1602, 64
    %v1606 = vpop.permute.xlu0 %1605
    %v1608 = vmul.f32 %v1602, %v1606
    %1610 = vrot.lane.b32.xlu0 %v1608, 32
    %v1611 = vpop.permute.xlu0 %1610
    %v1613 = vadd.f32 %v1603, %v1611
    %v1614 = vtanh.pop %v1613
    %1616 = vrot.lane.b32.xlu0 %v1614, 64
    %v1617 = vpop.permute.xlu0 %1616
    %v1619 = vmul.f32 %v1602, %v1617
    %v1620 = vpack.c.bf16 %v1619, %v1619
    %v1621 = vlaneseq
    %v1622 = vshrl.u32 %v1621, 7
    %v1623 = vsub.s32 0, %v1622
    %v1624 = vrot.slane %v54, %v1623
    %1626 = vrot.lane.b32.xlu0 %v1620, 32
    %v1627 = vpop.permute.xlu0 %1626
    %v1629 = vsel %vm179, %v1627, 0
    %1631 = vmatprep.subr.bf16.mxu0 0
    %1632 = vmatpush1.bf16.msra.mxu0 0
    %1633 = vmatprep.subr.bf16.mxu0 0
    %1634 = vmatpush1.bf16.msra.mxu0 0
    %1635 = vmatprep.subr.bf16.mxu0 0
    %1636 = vmatpush1.bf16.msra.mxu0 0
    %1637 = vmatprep.subr.bf16.mxu0 0
    %1638 = vmatpush1.bf16.msra.mxu0 0
    %1639 = vmatprep.subr.bf16.mxu0 0
    %1640 = vmatpush1.bf16.msra.mxu0 0
    %1641 = vmatprep.subr.bf16.mxu0 0
    %1642 = vmatpush1.bf16.msra.mxu0 0
    %1643 = vmatprep.subr.bf16.mxu0 0
    %1644 = vmatpush1.bf16.msra.mxu0 %v53
    %1645 = vmatprep.subr.bf16.mxu0 0
    %1646 = vmatpush1.bf16.msra.mxu0 %v52
    %1647 = vmatprep.subr.bf16.mxu0 0
    %1648 = vmatpush2.bf16.msra.mxu0 0
    %1649 = vmatprep.subr.bf16.mxu0 0
    %1650 = vmatpush2.bf16.msra.mxu0 0
    %1651 = vmatprep.subr.bf16.mxu0 0
    %1652 = vmatpush2.bf16.msra.mxu0 0
    %1653 = vmatprep.subr.bf16.mxu0 0
    %1654 = vmatpush2.bf16.msra.mxu0 0
    %1655 = vmatprep.subr.bf16.mxu0 0
    %1656 = vmatpush2.bf16.msra.mxu0 0
    %1657 = vmatprep.subr.bf16.mxu0 0
    %1658 = vmatpush2.bf16.msra.mxu0 0
    %1659 = vmatprep.subr.bf16.mxu0 0
    %1660 = vmatpush2.bf16.msra.mxu0 0
    %1661 = vmatprep.subr.bf16.mxu0 0
    %1662 = vmatpush2.bf16.msra.mxu0 0
    %1663 = vmatprep.mubr.bf16.mxu0 0
    %1664 = vmatmul.mubr.bf16.gmra.mxu0 %v1629
    %v1665 = vpop.f32.mrf.mxu0
    %v1666 = vadd.f32 %v1624, %v1665
    %v1667 = vpop.f32.mrf.mxu0
    %v1668 = vpop.f32.mrf.mxu0
    %v1669 = vpop.f32.mrf.mxu0
    %1670 = vdwg.mxu0
    %v1671 = vmax.f32 %v1666, 0.0
    %v1672 = vpack.c.bf16 %v1671, %v1671
    %v1673 = vlaneseq
    %v1674 = vshrl.u32 %v1673, 7
    %v1675 = vsub.s32 0, %v1674
    %v1676 = vrot.slane %v67, %v1675
    %vm1677 = vcmask 523264
    %v1679 = vsel %vm1677, %v1672, 0
    %1681 = vmatprep.subr.bf16.mxu0 0
    %1682 = vmatpush1.bf16.msra.mxu0 0
    %1683 = vmatprep.subr.bf16.mxu0 0
    %1684 = vmatpush1.bf16.msra.mxu0 0
    %1685 = vmatprep.subr.bf16.mxu0 0
    %1686 = vmatpush1.bf16.msra.mxu0 0
    %1687 = vmatprep.subr.bf16.mxu0 0
    %1688 = vmatpush1.bf16.msra.mxu0 0
    %1689 = vmatprep.subr.bf16.mxu0 0
    %1690 = vmatpush1.bf16.msra.mxu0 %v66
    %1691 = vmatprep.subr.bf16.mxu0 0
    %1692 = vmatpush1.bf16.msra.mxu0 %v65
    %1693 = vmatprep.subr.bf16.mxu0 0
    %1694 = vmatpush1.bf16.msra.mxu0 %v64
    %1695 = vmatprep.subr.bf16.mxu0 0
    %1696 = vmatpush1.bf16.msra.mxu0 %v63
    %1697 = vmatprep.subr.bf16.mxu0 0
    %1698 = vmatpush2.bf16.msra.mxu0 0
    %1699 = vmatprep.subr.bf16.mxu0 0
    %1700 = vmatpush2.bf16.msra.mxu0 0
    %1701 = vmatprep.subr.bf16.mxu0 0
    %1702 = vmatpush2.bf16.msra.mxu0 0
    %1703 = vmatprep.subr.bf16.mxu0 0
    %1704 = vmatpush2.bf16.msra.mxu0 0
    %1705 = vmatprep.subr.bf16.mxu0 0
    %1706 = vmatpush2.bf16.msra.mxu0 0
    %1707 = vmatprep.subr.bf16.mxu0 0
    %1708 = vmatpush2.bf16.msra.mxu0 0
    %1709 = vmatprep.subr.bf16.mxu0 0
    %1710 = vmatpush2.bf16.msra.mxu0 0
    %1711 = vmatprep.subr.bf16.mxu0 0
    %1712 = vmatpush2.bf16.msra.mxu0 0
    %1713 = vmatprep.mubr.bf16.mxu0 0
    %1714 = vmatmul.mubr.bf16.gmra.mxu0 %v1679
    %v1715 = vpop.f32.mrf.mxu0
    %v1716 = vadd.f32 %v1676, %v1715
    %v1717 = vpop.f32.mrf.mxu0
    %v1718 = vpop.f32.mrf.mxu0
    %v1719 = vpop.f32.mrf.mxu0
    %1720 = vdwg.mxu0
    %v1721 = vmax.f32 %v1716, 0.0
    %v1722 = vpack.c.bf16 %v1721, %v1721
    %v1723 = vlaneseq
    %v1724 = vshrl.u32 %v1723, 7
    %v1725 = vsub.s32 0, %v1724
    %v1726 = vrot.slane %v74, %v1725
    %v1728 = vsel %vm179, %v1722, 0
    %1730 = vmatprep.subr.bf16.mxu0 0
    %1731 = vmatpush1.bf16.msra.mxu0 0
    %1732 = vmatprep.subr.bf16.mxu0 0
    %1733 = vmatpush1.bf16.msra.mxu0 0
    %1734 = vmatprep.subr.bf16.mxu0 0
    %1735 = vmatpush1.bf16.msra.mxu0 0
    %1736 = vmatprep.subr.bf16.mxu0 0
    %1737 = vmatpush1.bf16.msra.mxu0 0
    %1738 = vmatprep.subr.bf16.mxu0 0
    %1739 = vmatpush1.bf16.msra.mxu0 0
    %1740 = vmatprep.subr.bf16.mxu0 0
    %1741 = vmatpush1.bf16.msra.mxu0 0
    %1742 = vmatprep.subr.bf16.mxu0 0
    %1743 = vmatpush1.bf16.msra.mxu0 %v73
    %1744 = vmatprep.subr.bf16.mxu0 0
    %1745 = vmatpush1.bf16.msra.mxu0 %v72
    %1746 = vmatprep.subr.bf16.mxu0 0
    %1747 = vmatpush2.bf16.msra.mxu0 0
    %1748 = vmatprep.subr.bf16.mxu0 0
    %1749 = vmatpush2.bf16.msra.mxu0 0
    %1750 = vmatprep.subr.bf16.mxu0 0
    %1751 = vmatpush2.bf16.msra.mxu0 0
    %1752 = vmatprep.subr.bf16.mxu0 0
    %1753 = vmatpush2.bf16.msra.mxu0 0
    %1754 = vmatprep.subr.bf16.mxu0 0
    %1755 = vmatpush2.bf16.msra.mxu0 0
    %1756 = vmatprep.subr.bf16.mxu0 0
    %1757 = vmatpush2.bf16.msra.mxu0 0
    %1758 = vmatprep.subr.bf16.mxu0 0
    %1759 = vmatpush2.bf16.msra.mxu0 0
    %1760 = vmatprep.subr.bf16.mxu0 0
    %1761 = vmatpush2.bf16.msra.mxu0 0
    %1762 = vmatprep.mubr.bf16.mxu0 0
    %1763 = vmatmul.mubr.bf16.gmra.mxu0 %v1728
    %v1764 = vpop.f32.mrf.mxu0
    %v1765 = vadd.f32 %v1726, %v1764
    %v1766 = vpop.f32.mrf.mxu0
    %v1767 = vpop.f32.mrf.mxu0
    %v1768 = vpop.f32.mrf.mxu0
    %1769 = vdwg.mxu0
    %vm1770 = vcmask 7168
    %1771 = vst.msk [vmem:[%s2] sm:$0xff] %vm1770, %v1765
    // Predicated region
    $region14: #{forward.1} parent=1 // pred_check
      _
    $region15: #{forward.1} parent=1 // pred_check_branch
      %1773 = sbr.rel (0) target = $region17
    $region16: #{forward.1} parent=1 // pred_region
      _
    $region17: #{forward.1} parent=1 // pred_fallthru
      _
    // Predicated region
    $region18: #{forward.1} parent=1 // pred_check
      _
    $region19: #{forward.1} parent=1 // pred_check_branch
      %1775 = sbr.rel (0) target = $region21
    $region20: #{forward.1} parent=1 // pred_region
      _
    $region21: #{forward.1} parent=1 // pred_fallthru
      _
    %1776 = vsyncpa [#allocation3], 1

</llo_original>
